<compile_context>
chip_gen: v6e
topology: v6e:2x2x1
jax: 0.10.0
libtpu: 0.0.40
codegen_flags: <defaults>
</compile_context>

<pallas_src>
from functools import partial

import jax
import jax.numpy as jnp
from jax import lax
from jax.experimental import pallas as pl
from jax.experimental.pallas import tpu as pltpu


# ----------------------------------------------------------------------------- kernel ---
def _repvggdw_kernel(x_ref, halo_ref, w_ref, b_ref, o_ref, xp_ref, *, col0, rh):
    # x_ref   : (1, TH, W, CB)    activation tile (input dtype; bf16 stays bf16 on the wire)
    # halo_ref: (1, 1, 2, W, CB)  row just above / just below this tile (zeros at image edge)
    # w_ref   : (9, CB)           fused depthwise taps (compute dtype)
    # b_ref   : (1, CB)           fused bias (compute dtype)
    # o_ref   : (1, TH, W, CB)
    # xp_ref  : (TH + 2, Wp, CB)  VMEM scratch (compute dtype); interior at column `col0`
    TH, W, CB = o_ref.shape[1], o_ref.shape[2], o_ref.shape[3]
    cdt = xp_ref.dtype

    # --- build the haloed slab in VMEM (activation read from HBM exactly once) ----------
    zero_col = jnp.zeros((TH + 2, 1, CB), cdt)
    xp_ref[:, col0 - 1:col0, :] = zero_col                      # left border column
    xp_ref[:, col0 + W:col0 + W + 1, :] = zero_col              # right border column
    xp_ref[0:1, col0:col0 + W, :] = halo_ref[0, 0, 0:1, :, :].astype(cdt)          # row above
    xp_ref[TH + 1:TH + 2, col0:col0 + W, :] = halo_ref[0, 0, 1:2, :, :].astype(cdt)  # row below
    # Sublane-aligned interior store (col0 is a multiple of the sublane packing).
    xp_ref[1:TH + 1, col0:col0 + W, :] = x_ref[0, :, :, :].astype(cdt)

    # Hoist per-channel taps / bias (and their broadcast shape) out of the row loop.
    taps = [w_ref[t:t + 1, :].reshape(1, 1, CB) for t in range(9)]
    bias = b_ref[0:1, :].reshape(1, 1, CB)

    n_groups = TH // rh   # rh divides TH by construction

    def row_group(r, carry):
        base = pl.multiple_of(r * rh, rh)
        # tap t = (dh, dw); output row j uses scratch row base + j + dh, column col0-1+dw+c
        acc = xp_ref[pl.ds(base, rh), col0 - 1:col0 - 1 + W, :] * taps[0]
        for t in range(1, 9):
            dh, dw = divmod(t, 3)
            acc = acc + xp_ref[pl.ds(base + dh, rh),
                               col0 - 1 + dw:col0 - 1 + dw + W, :] * taps[t]
        o_ref[0, pl.ds(base, rh), :, :] = (acc + bias).astype(o_ref.dtype)
        return carry

    lax.fori_loop(0, n_groups, row_group, 0, unroll=(n_groups <= 8))


# ------------------------------------------------------------------------- host helpers ---
def _chip_vmem_bytes():
    try:
        cap = getattr(pltpu.get_tpu_info(), "vmem_capacity_bytes", None)
        if cap:
            return int(cap)
    except Exception:
        pass
    return 64 * 1024 * 1024      # conservative fallback: v7x has 64 MiB per TensorCore


def _choose_tiling(H, W, C_pad, itemsize, target_bytes):
    """Pick (CB, TH).  Prefer CB == C_pad (contiguous HBM slabs); fall back to 128-lane
    channel blocks when a full-C row tile would force TH below 8.  TH snaps to a divisor
    of H so every tile is full."""
    def th_for(cb):
        row_bytes = W * cb * itemsize
        th = max(1, min(H, target_bytes // max(row_bytes, 1)))
        while H % th:
            th -= 1
        return th

    cb = C_pad
    th = th_for(cb)
    if C_pad > 128 and th < min(H, 8):
        cb = 128
        th = th_for(cb)
    return cb, th


def _choose_row_group(TH, W, CB, compute_itemsize, budget_vregs=16):
    """Rows per accumulator group so the (rh, W, CB) accumulator stays ~<= budget vregs."""
    sub = 8 * (4 // compute_itemsize)             # W rows per vreg (8 for f32, 16 for bf16)
    per_row = -(-W // sub) * max(CB // 128, 1)    # vregs per accumulator row
    rh = max(1, min(TH, budget_vregs // max(per_row, 1)))
    while TH % rh:
        rh -= 1
    return rh


def _build_row_halos(x, TH):
    """x: (N, H, W, C).  Returns (N, n_ht, 2, W, C): row above / below each TH-row tile
    (zeros at the image border)."""
    N, H, W, C = x.shape
    n_ht = H // TH
    zero = jnp.zeros((N, 1, W, C), x.dtype)
    if n_ht > 1:
        above = jnp.concatenate([zero, x[:, TH - 1:H - 1:TH]], axis=1)
        below = jnp.concatenate([x[:, TH:H:TH], zero], axis=1)
    else:
        above, below = zero, zero
    return jnp.stack([above, below], axis=2)


def fold_repvggdw_params(w3, w1, bn3, bn1, eps=1e-5):
    """One-time glue: fold BN (eval mode), the 1x1 branch and the identity into a single
    depthwise 3x3 weight (9, C) + bias (1, C), exactly like RepVGGDW.fuse()."""
    C = w3.shape[0]
    scale3 = bn3["gamma"] / jnp.sqrt(bn3["var"] + eps)
    shift3 = bn3["beta"] - bn3["mean"] * scale3
    scale1 = bn1["gamma"] / jnp.sqrt(bn1["var"] + eps)
    shift1 = bn1["beta"] - bn1["mean"] * scale1

    w3_eff = w3[:, 0, :, :] * scale3[:, None, None]              # (C, 3, 3)
    center = w1[:, 0, 0, 0] * scale1 + 1.0                       # 1x1 branch + identity
    w3_eff = w3_eff.at[:, 1, 1].add(center)

    w_k = jnp.transpose(w3_eff.reshape(C, 9), (1, 0)).astype(jnp.float32)   # (9, C), t = kh*3+kw
    b_k = (shift3 + shift1).reshape(1, C).astype(jnp.float32)               # (1, C)
    return w_k, b_k


# ------------------------------------------------------------------------- entry points ---
def repvggdw_forward_nhwc(x_nhwc, w_k, b_k, *, compute_dtype=None,
                          block_bytes_target=1 << 20):
    """Kernel entry point.  x_nhwc: (N, H, W, C) in its native dtype (f32 or bf16)."""
    N, H, W, C = x_nhwc.shape
    if compute_dtype is None:
        # bf16 activations -> bf16 stencil (v6e/v7x VPU is bf16-capable: ~2x VALU, half scratch).
        compute_dtype = jnp.bfloat16 if x_nhwc.dtype == jnp.bfloat16 else jnp.float32
    compute_dtype = jnp.dtype(compute_dtype)

    # Lane-dense channels: pad C to a multiple of 128, slice back afterwards.
    C_pad = ((C + 127) // 128) * 128
    if C_pad != C:
        x_p = jnp.pad(x_nhwc, ((0, 0), (0, 0), (0, 0), (0, C_pad - C)))
        w_p = jnp.pad(w_k, ((0, 0), (0, C_pad - C)))
        b_p = jnp.pad(b_k, ((0, 0), (0, C_pad - C)))
    else:
        x_p, w_p, b_p = x_nhwc, w_k, b_k
    w_p = w_p.astype(compute_dtype)
    b_p = b_p.astype(compute_dtype)

    in_isize = jnp.dtype(x_nhwc.dtype).itemsize
    c_isize = compute_dtype.itemsize

    CB, TH = _choose_tiling(H, W, C_pad, in_isize, block_bytes_target)
    n_cb, n_ht = C_pad // CB, H // TH
    rh = _choose_row_group(TH, W, CB, c_isize)

    # Halo rows for each H tile as a small side input (2 rows per tile).
    halos = _build_row_halos(x_p, TH)

    sub = 8 * (4 // c_isize)                        # sublane packing of the compute dtype
    col0 = sub                                      # aligned interior column base
    Wp = ((col0 + W + 1 + sub - 1) // sub) * sub    # scratch width >= col0 + W + 1

    # VMEM budget: double-buffered in/halo/out blocks + weights + the halo scratch,
    # capped by the actual chip's VMEM (v7x: 64 MiB per TensorCore).
    blk_in = TH * W * CB * in_isize
    blk_halo = 2 * W * CB * in_isize
    blk_wb = 10 * CB * c_isize
    scratch_b = (TH + 2) * Wp * CB * c_isize
    vmem_need = 2 * (2 * blk_in + blk_halo + blk_wb) + scratch_b
    vmem_limit = int(min(max(2 * vmem_need, 32 << 20), int(0.8 * _chip_vmem_bytes())))

    kernel = partial(_repvggdw_kernel, col0=col0, rh=rh)
    out = pl.pallas_call(
        kernel,
        out_shape=jax.ShapeDtypeStruct((N, H, W, C_pad), x_nhwc.dtype),
        grid_spec=pltpu.PrefetchScalarGridSpec(
            num_scalar_prefetch=0,
            grid=(N, n_cb, n_ht),          # H-tile axis innermost: streams tiles along H
            in_specs=[
                pl.BlockSpec((1, TH, W, CB), lambda n, cb, t: (n, t, 0, cb)),
                pl.BlockSpec((1, 1, 2, W, CB), lambda n, cb, t: (n, t, 0, 0, cb)),
                pl.BlockSpec((9, CB), lambda n, cb, t: (0, cb)),
                pl.BlockSpec((1, CB), lambda n, cb, t: (0, cb)),
            ],
            out_specs=pl.BlockSpec((1, TH, W, CB), lambda n, cb, t: (n, t, 0, cb)),
            scratch_shapes=[pltpu.VMEM((TH + 2, Wp, CB), compute_dtype)],
        ),
        compiler_params=pltpu.CompilerParams(
            dimension_semantics=("parallel", "parallel", "parallel"),
            vmem_limit_bytes=vmem_limit,
        ),
    )(x_p, halos, w_p, b_p)

    return out[..., :C] if C_pad != C else out


def repvggdw_forward(x_nchw, w3, w1, bn3, bn1, eps=1e-5, **kw):
    """NCHW drop-in wrapper (PyTorch parity).  An end-to-end NHWC JAX model should keep
    activations NHWC and call repvggdw_forward_nhwc directly (no transposes)."""
    w_k, b_k = fold_repvggdw_params(w3, w1, bn3, bn1, eps)
    x_nhwc = jnp.transpose(x_nchw, (0, 2, 3, 1))
    out_nhwc = repvggdw_forward_nhwc(x_nhwc, w_k, b_k, **kw)
    return jnp.transpose(out_nhwc, (0, 3, 1, 2))


# ---------------------------------------------------------------------------- reference ---
def repvggdw_reference(x_nchw, w3, w1, bn3, bn1, eps=1e-5):
    """Pure-JAX reference (lax depthwise conv + BN eval), NCHW."""
    C = x_nchw.shape[1]
    conv3 = lax.conv_general_dilated(
        x_nchw, w3, window_strides=(1, 1), padding=((1, 1), (1, 1)),
        feature_group_count=C, dimension_numbers=("NCHW", "OIHW", "NCHW"))
    conv1 = x_nchw * w1[:, 0, 0, 0][None, :, None, None]

    def bn(y, p):
        s = p["gamma"] / jnp.sqrt(p["var"] + eps)
        return y * s[None, :, None, None] + (p["beta"] - p["mean"] * s)[None, :, None, None]

    return bn(conv3, bn3) + bn(conv1, bn1) + x_nchw


def _fresh_bn(C):
    # Fresh Conv2d_BN BatchNorm state (eval mode): weight=1, bias=0, mean=0, var=1.
    return dict(gamma=jnp.ones((C,)), beta=jnp.zeros((C,)),
                mean=jnp.zeros((C,)), var=jnp.ones((C,)))


def _rand_params(key, C):
    k3, k1 = jax.random.split(key)
    w3 = jax.random.normal(k3, (C, 1, 3, 3), dtype=jnp.float32) * 0.1
    w1 = jax.random.normal(k1, (C, 1, 1, 1), dtype=jnp.float32) * 0.1
    return w3, w1, _fresh_bn(C), _fresh_bn(C)


if __name__ == "__main__":
    key = jax.random.PRNGKey(0)
    k_x, k_p, k_x3, k_p3, k_x4, k_p4 = jax.random.split(key, 6)

    # --- 1) primary test: PyTorch-like shape (N, C, H, W) = (2, 4, 16, 16), f32 ---------
    N, C, H, W = 2, 4, 16, 16
    x = jax.random.normal(k_x, (N, C, H, W), dtype=jnp.float32)
    w3, w1, bn3, bn1 = _rand_params(k_p, C)

    out = jax.block_until_ready(repvggdw_forward(x, w3, w1, bn3, bn1))
    ref = repvggdw_reference(x, w3, w1, bn3, bn1)
    assert out.shape == (N, C, H, W)
    assert jnp.allclose(out, ref, atol=1e-5, rtol=1e-5), "f32 mismatch vs reference"

    # --- 2) bf16 activations: bf16 DMA + bf16 stencil --------------------------------
    x_bf = x.astype(jnp.bfloat16)
    out_bf = jax.block_until_ready(repvggdw_forward(x_bf, w3, w1, bn3, bn1))
    ref_bf = repvggdw_reference(x_bf.astype(jnp.float32), w3, w1, bn3, bn1)
    assert out_bf.dtype == jnp.bfloat16
    assert jnp.allclose(out_bf.astype(jnp.float32), ref_bf, atol=1.5e-1, rtol=1e-1), \
        "bf16 mismatch vs reference"

    # --- 3) forced H-tiling (n_ht > 1) to exercise the halo path ----------------------
    C3, H3, W3 = 128, 16, 16
    x3 = jax.random.normal(k_x3, (1, C3, H3, W3), dtype=jnp.float32)
    w3_3, w1_3, bn3_3, bn1_3 = _rand_params(k_p3, C3)
    out3 = jax.block_until_ready(
        repvggdw_forward(x3, w3_3, w1_3, bn3_3, bn1_3, block_bytes_target=32 * 1024))
    ref3 = repvggdw_reference(x3, w3_3, w1_3, bn3_3, bn1_3)
    assert jnp.allclose(out3, ref3, atol=1e-5, rtol=1e-5), "H-tiled mismatch vs reference"

    # --- 4) wide-channel path (CB = C_pad = 256 contiguous blocks) --------------------
    C4, H4, W4 = 256, 8, 8
    x4 = jax.random.normal(k_x4, (1, C4, H4, W4), dtype=jnp.float32)
    w3_4, w1_4, bn3_4, bn1_4 = _rand_params(k_p4, C4)
    out4 = jax.block_until_ready(repvggdw_forward(x4, w3_4, w1_4, bn3_4, bn1_4))
    ref4 = repvggdw_reference(x4, w3_4, w1_4, bn3_4, bn1_4)
    assert jnp.allclose(out4, ref4, atol=1e-5, rtol=1e-5), "C=256 mismatch vs reference"

    print("KERNEL_OK")
</pallas_src>

<mosaic_0001>
module attributes {stable_mosaic.version = 11 : i64} {
  func.func @_repvggdw_kernel(%arg0: i32, %arg1: i32, %arg2: i32, %arg3: memref<1x16x16x128xf32, #tpu.memory_space<vmem>>, %arg4: memref<1x1x2x16x128xf32, #tpu.memory_space<vmem>>, %arg5: memref<9x128xf32, #tpu.memory_space<vmem>>, %arg6: memref<1x128xf32, #tpu.memory_space<vmem>>, %arg7: memref<1x16x16x128xf32, #tpu.memory_space<vmem>>, %arg8: memref<18x32x128xf32, #tpu.memory_space<vmem>>) attributes {dimension_semantics = [#tpu.dimension_semantics<parallel>, #tpu.dimension_semantics<parallel>, #tpu.dimension_semantics<parallel>], iteration_bounds = array<i64: 2, 1, 1>, scalar_prefetch = 0 : i64, scratch_operands = 1 : i64, tpu.core_type = #tpu.core_type<tc>, window_params = [{transform_indices = @transform_0, window_bounds = array<i64: 1, 16, 16, 128>}, {transform_indices = @transform_1, window_bounds = array<i64: 1, 1, 2, 16, 128>}, {transform_indices = @transform_2, window_bounds = array<i64: 9, 128>}, {transform_indices = @transform_3, window_bounds = array<i64: 1, 128>}, {transform_indices = @transform_4, window_bounds = array<i64: 1, 16, 16, 128>}]} {
    %cst = arith.constant 0.000000e+00 : f32
    %0 = vector.broadcast %cst : f32 to vector<18x1x128xf32>
    %c0 = arith.constant 0 : index
    %c7 = arith.constant 7 : index
    %c0_0 = arith.constant 0 : index
    %1 = vector.load %arg8[%c0, %c7, %c0_0] : memref<18x32x128xf32, #tpu.memory_space<vmem>>, vector<18x1x128xf32>
    tpu.vector_store %arg8[%c0, %c7, %c0_0], %0 {strides = array<i32>} : memref<18x32x128xf32, #tpu.memory_space<vmem>>, vector<18x1x128xf32>,
    %c0_1 = arith.constant 0 : index
    %c24 = arith.constant 24 : index
    %c0_2 = arith.constant 0 : index
    %2 = vector.load %arg8[%c0_1, %c24, %c0_2] : memref<18x32x128xf32, #tpu.memory_space<vmem>>, vector<18x1x128xf32>
    tpu.vector_store %arg8[%c0_1, %c24, %c0_2], %0 {strides = array<i32>} : memref<18x32x128xf32, #tpu.memory_space<vmem>>, vector<18x1x128xf32>,
    %c0_3 = arith.constant 0 : index
    %c0_4 = arith.constant 0 : index
    %c0_5 = arith.constant 0 : index
    %c0_6 = arith.constant 0 : index
    %c0_7 = arith.constant 0 : index
    %3 = vector.load %arg4[%c0_3, %c0_4, %c0_5, %c0_6, %c0_7] : memref<1x1x2x16x128xf32, #tpu.memory_space<vmem>>, vector<1x1x1x16x128xf32>
    %4 = vector.shape_cast %3 : vector<1x1x1x16x128xf32> to vector<1x16x128xf32>
    %c0_8 = arith.constant 0 : index
    %c8 = arith.constant 8 : index
    %c0_9 = arith.constant 0 : index
    %5 = vector.load %arg8[%c0_8, %c8, %c0_9] : memref<18x32x128xf32, #tpu.memory_space<vmem>>, vector<1x16x128xf32>
    tpu.vector_store %arg8[%c0_8, %c8, %c0_9], %4 {strides = array<i32>} : memref<18x32x128xf32, #tpu.memory_space<vmem>>, vector<1x16x128xf32>,
    %c0_10 = arith.constant 0 : index
    %c0_11 = arith.constant 0 : index
    %c1 = arith.constant 1 : index
    %c0_12 = arith.constant 0 : index
    %c0_13 = arith.constant 0 : index
    %6 = vector.load %arg4[%c0_10, %c0_11, %c1, %c0_12, %c0_13] : memref<1x1x2x16x128xf32, #tpu.memory_space<vmem>>, vector<1x1x1x16x128xf32>
    %7 = vector.shape_cast %6 : vector<1x1x1x16x128xf32> to vector<1x16x128xf32>
    %c17 = arith.constant 17 : index
    %c8_14 = arith.constant 8 : index
    %c0_15 = arith.constant 0 : index
    %8 = vector.load %arg8[%c17, %c8_14, %c0_15] : memref<18x32x128xf32, #tpu.memory_space<vmem>>, vector<1x16x128xf32>
    tpu.vector_store %arg8[%c17, %c8_14, %c0_15], %7 {strides = array<i32>} : memref<18x32x128xf32, #tpu.memory_space<vmem>>, vector<1x16x128xf32>,
    %c0_16 = arith.constant 0 : index
    %c0_17 = arith.constant 0 : index
    %c0_18 = arith.constant 0 : index
    %c0_19 = arith.constant 0 : index
    %9 = vector.load %arg3[%c0_16, %c0_17, %c0_18, %c0_19] : memref<1x16x16x128xf32, #tpu.memory_space<vmem>>, vector<1x16x16x128xf32>
    %10 = vector.shape_cast %9 : vector<1x16x16x128xf32> to vector<16x16x128xf32>
    %c1_20 = arith.constant 1 : index
    %c8_21 = arith.constant 8 : index
    %c0_22 = arith.constant 0 : index
    %11 = vector.load %arg8[%c1_20, %c8_21, %c0_22] : memref<18x32x128xf32, #tpu.memory_space<vmem>>, vector<16x16x128xf32>
    tpu.vector_store %arg8[%c1_20, %c8_21, %c0_22], %10 {strides = array<i32>} : memref<18x32x128xf32, #tpu.memory_space<vmem>>, vector<16x16x128xf32>,
    %c0_23 = arith.constant 0 : index
    %c0_24 = arith.constant 0 : index
    %12 = vector.load %arg5[%c0_23, %c0_24] : memref<9x128xf32, #tpu.memory_space<vmem>>, vector<1x128xf32>
    %13 = vector.shape_cast %12 : vector<1x128xf32> to vector<1x1x128xf32>
    %c1_25 = arith.constant 1 : index
    %c0_26 = arith.constant 0 : index
    %14 = vector.load %arg5[%c1_25, %c0_26] : memref<9x128xf32, #tpu.memory_space<vmem>>, vector<1x128xf32>
    %15 = vector.shape_cast %14 : vector<1x128xf32> to vector<1x1x128xf32>
    %c2 = arith.constant 2 : index
    %c0_27 = arith.constant 0 : index
    %16 = vector.load %arg5[%c2, %c0_27] : memref<9x128xf32, #tpu.memory_space<vmem>>, vector<1x128xf32>
    %17 = vector.shape_cast %16 : vector<1x128xf32> to vector<1x1x128xf32>
    %c3 = arith.constant 3 : index
    %c0_28 = arith.constant 0 : index
    %18 = vector.load %arg5[%c3, %c0_28] : memref<9x128xf32, #tpu.memory_space<vmem>>, vector<1x128xf32>
    %19 = vector.shape_cast %18 : vector<1x128xf32> to vector<1x1x128xf32>
    %c4 = arith.constant 4 : index
    %c0_29 = arith.constant 0 : index
    %20 = vector.load %arg5[%c4, %c0_29] : memref<9x128xf32, #tpu.memory_space<vmem>>, vector<1x128xf32>
    %21 = vector.shape_cast %20 : vector<1x128xf32> to vector<1x1x128xf32>
    %c5 = arith.constant 5 : index
    %c0_30 = arith.constant 0 : index
    %22 = vector.load %arg5[%c5, %c0_30] : memref<9x128xf32, #tpu.memory_space<vmem>>, vector<1x128xf32>
    %23 = vector.shape_cast %22 : vector<1x128xf32> to vector<1x1x128xf32>
    %c6 = arith.constant 6 : index
    %c0_31 = arith.constant 0 : index
    %24 = vector.load %arg5[%c6, %c0_31] : memref<9x128xf32, #tpu.memory_space<vmem>>, vector<1x128xf32>
    %25 = vector.shape_cast %24 : vector<1x128xf32> to vector<1x1x128xf32>
    %c7_32 = arith.constant 7 : index
    %c0_33 = arith.constant 0 : index
    %26 = vector.load %arg5[%c7_32, %c0_33] : memref<9x128xf32, #tpu.memory_space<vmem>>, vector<1x128xf32>
    %27 = vector.shape_cast %26 : vector<1x128xf32> to vector<1x1x128xf32>
    %c8_34 = arith.constant 8 : index
    %c0_35 = arith.constant 0 : index
    %28 = vector.load %arg5[%c8_34, %c0_35] : memref<9x128xf32, #tpu.memory_space<vmem>>, vector<1x128xf32>
    %29 = vector.shape_cast %28 : vector<1x128xf32> to vector<1x1x128xf32>
    %c0_36 = arith.constant 0 : index
    %c0_37 = arith.constant 0 : index
    %30 = vector.load %arg6[%c0_36, %c0_37] : memref<1x128xf32, #tpu.memory_space<vmem>>, vector<1x128xf32>
    %31 = vector.shape_cast %30 : vector<1x128xf32> to vector<1x1x128xf32>
    %c0_i32 = arith.constant 0 : i32
    %c8_i32 = arith.constant 8 : i32
    %32 = arith.muli %c0_i32, %c8_i32 : i32
    %33 = tpu.assume_multiple %32, 8 : i32
    %34 = arith.index_cast %33 : i32 to index
    %c7_38 = arith.constant 7 : index
    %c0_39 = arith.constant 0 : index
    %35 = vector.load %arg8[%34, %c7_38, %c0_39] : memref<18x32x128xf32, #tpu.memory_space<vmem>>, vector<8x16x128xf32>
    %36 = vector.broadcast %13 : vector<1x1x128xf32> to vector<8x16x128xf32>
    %37 = arith.mulf %35, %36 : vector<8x16x128xf32>
    %c0_i32_40 = arith.constant 0 : i32
    %38 = arith.addi %33, %c0_i32_40 : i32
    %39 = arith.index_cast %38 : i32 to index
    %c8_41 = arith.constant 8 : index
    %c0_42 = arith.constant 0 : index
    %40 = vector.load %arg8[%39, %c8_41, %c0_42] : memref<18x32x128xf32, #tpu.memory_space<vmem>>, vector<8x16x128xf32>
    %41 = vector.broadcast %15 : vector<1x1x128xf32> to vector<8x16x128xf32>
    %42 = arith.mulf %40, %41 : vector<8x16x128xf32>
    %43 = arith.addf %37, %42 : vector<8x16x128xf32>
    %c0_i32_43 = arith.constant 0 : i32
    %44 = arith.addi %33, %c0_i32_43 : i32
    %45 = arith.index_cast %44 : i32 to index
    %c9 = arith.constant 9 : index
    %c0_44 = arith.constant 0 : index
    %46 = vector.load %arg8[%45, %c9, %c0_44] : memref<18x32x128xf32, #tpu.memory_space<vmem>>, vector<8x16x128xf32>
    %47 = vector.broadcast %17 : vector<1x1x128xf32> to vector<8x16x128xf32>
    %48 = arith.mulf %46, %47 : vector<8x16x128xf32>
    %49 = arith.addf %43, %48 : vector<8x16x128xf32>
    %c1_i32 = arith.constant 1 : i32
    %50 = arith.addi %33, %c1_i32 : i32
    %51 = arith.index_cast %50 : i32 to index
    %c7_45 = arith.constant 7 : index
    %c0_46 = arith.constant 0 : index
    %52 = vector.load %arg8[%51, %c7_45, %c0_46] : memref<18x32x128xf32, #tpu.memory_space<vmem>>, vector<8x16x128xf32>
    %53 = vector.broadcast %19 : vector<1x1x128xf32> to vector<8x16x128xf32>
    %54 = arith.mulf %52, %53 : vector<8x16x128xf32>
    %55 = arith.addf %49, %54 : vector<8x16x128xf32>
    %c1_i32_47 = arith.constant 1 : i32
    %56 = arith.addi %33, %c1_i32_47 : i32
    %57 = arith.index_cast %56 : i32 to index
    %c8_48 = arith.constant 8 : index
    %c0_49 = arith.constant 0 : index
    %58 = vector.load %arg8[%57, %c8_48, %c0_49] : memref<18x32x128xf32, #tpu.memory_space<vmem>>, vector<8x16x128xf32>
    %59 = vector.broadcast %21 : vector<1x1x128xf32> to vector<8x16x128xf32>
    %60 = arith.mulf %58, %59 : vector<8x16x128xf32>
    %61 = arith.addf %55, %60 : vector<8x16x128xf32>
    %c1_i32_50 = arith.constant 1 : i32
    %62 = arith.addi %33, %c1_i32_50 : i32
    %63 = arith.index_cast %62 : i32 to index
    %c9_51 = arith.constant 9 : index
    %c0_52 = arith.constant 0 : index
    %64 = vector.load %arg8[%63, %c9_51, %c0_52] : memref<18x32x128xf32, #tpu.memory_space<vmem>>, vector<8x16x128xf32>
    %65 = vector.broadcast %23 : vector<1x1x128xf32> to vector<8x16x128xf32>
    %66 = arith.mulf %64, %65 : vector<8x16x128xf32>
    %67 = arith.addf %61, %66 : vector<8x16x128xf32>
    %c2_i32 = arith.constant 2 : i32
    %68 = arith.addi %33, %c2_i32 : i32
    %69 = arith.index_cast %68 : i32 to index
    %c7_53 = arith.constant 7 : index
    %c0_54 = arith.constant 0 : index
    %70 = vector.load %arg8[%69, %c7_53, %c0_54] : memref<18x32x128xf32, #tpu.memory_space<vmem>>, vector<8x16x128xf32>
    %71 = vector.broadcast %25 : vector<1x1x128xf32> to vector<8x16x128xf32>
    %72 = arith.mulf %70, %71 : vector<8x16x128xf32>
    %73 = arith.addf %67, %72 : vector<8x16x128xf32>
    %c2_i32_55 = arith.constant 2 : i32
    %74 = arith.addi %33, %c2_i32_55 : i32
    %75 = arith.index_cast %74 : i32 to index
    %c8_56 = arith.constant 8 : index
    %c0_57 = arith.constant 0 : index
    %76 = vector.load %arg8[%75, %c8_56, %c0_57] : memref<18x32x128xf32, #tpu.memory_space<vmem>>, vector<8x16x128xf32>
    %77 = vector.broadcast %27 : vector<1x1x128xf32> to vector<8x16x128xf32>
    %78 = arith.mulf %76, %77 : vector<8x16x128xf32>
    %79 = arith.addf %73, %78 : vector<8x16x128xf32>
    %c2_i32_58 = arith.constant 2 : i32
    %80 = arith.addi %33, %c2_i32_58 : i32
    %81 = arith.index_cast %80 : i32 to index
    %c9_59 = arith.constant 9 : index
    %c0_60 = arith.constant 0 : index
    %82 = vector.load %arg8[%81, %c9_59, %c0_60] : memref<18x32x128xf32, #tpu.memory_space<vmem>>, vector<8x16x128xf32>
    %83 = vector.broadcast %29 : vector<1x1x128xf32> to vector<8x16x128xf32>
    %84 = arith.mulf %82, %83 : vector<8x16x128xf32>
    %85 = arith.addf %79, %84 : vector<8x16x128xf32>
    %86 = vector.broadcast %31 : vector<1x1x128xf32> to vector<8x16x128xf32>
    %87 = arith.addf %85, %86 : vector<8x16x128xf32>
    %c0_61 = arith.constant 0 : index
    %88 = arith.index_cast %33 : i32 to index
    %c0_62 = arith.constant 0 : index
    %c0_63 = arith.constant 0 : index
    %89 = vector.load %arg7[%c0_61, %88, %c0_62, %c0_63] : memref<1x16x16x128xf32, #tpu.memory_space<vmem>>, vector<1x8x16x128xf32>
    %90 = vector.shape_cast %89 : vector<1x8x16x128xf32> to vector<8x16x128xf32>
    %91 = vector.shape_cast %87 : vector<8x16x128xf32> to vector<1x8x16x128xf32>
    tpu.vector_store %arg7[%c0_61, %88, %c0_62, %c0_63], %91 {strides = array<i32>} : memref<1x16x16x128xf32, #tpu.memory_space<vmem>>, vector<1x8x16x128xf32>,
    %c1_i32_64 = arith.constant 1 : i32
    %c8_i32_65 = arith.constant 8 : i32
    %92 = arith.muli %c1_i32_64, %c8_i32_65 : i32
    %93 = tpu.assume_multiple %92, 8 : i32
    %94 = arith.index_cast %93 : i32 to index
    %c7_66 = arith.constant 7 : index
    %c0_67 = arith.constant 0 : index
    %95 = vector.load %arg8[%94, %c7_66, %c0_67] : memref<18x32x128xf32, #tpu.memory_space<vmem>>, vector<8x16x128xf32>
    %96 = vector.broadcast %13 : vector<1x1x128xf32> to vector<8x16x128xf32>
    %97 = arith.mulf %95, %96 : vector<8x16x128xf32>
    %c0_i32_68 = arith.constant 0 : i32
    %98 = arith.addi %93, %c0_i32_68 : i32
    %99 = arith.index_cast %98 : i32 to index
    %c8_69 = arith.constant 8 : index
    %c0_70 = arith.constant 0 : index
    %100 = vector.load %arg8[%99, %c8_69, %c0_70] : memref<18x32x128xf32, #tpu.memory_space<vmem>>, vector<8x16x128xf32>
    %101 = vector.broadcast %15 : vector<1x1x128xf32> to vector<8x16x128xf32>
    %102 = arith.mulf %100, %101 : vector<8x16x128xf32>
    %103 = arith.addf %97, %102 : vector<8x16x128xf32>
    %c0_i32_71 = arith.constant 0 : i32
    %104 = arith.addi %93, %c0_i32_71 : i32
    %105 = arith.index_cast %104 : i32 to index
    %c9_72 = arith.constant 9 : index
    %c0_73 = arith.constant 0 : index
    %106 = vector.load %arg8[%105, %c9_72, %c0_73] : memref<18x32x128xf32, #tpu.memory_space<vmem>>, vector<8x16x128xf32>
    %107 = vector.broadcast %17 : vector<1x1x128xf32> to vector<8x16x128xf32>
    %108 = arith.mulf %106, %107 : vector<8x16x128xf32>
    %109 = arith.addf %103, %108 : vector<8x16x128xf32>
    %c1_i32_74 = arith.constant 1 : i32
    %110 = arith.addi %93, %c1_i32_74 : i32
    %111 = arith.index_cast %110 : i32 to index
    %c7_75 = arith.constant 7 : index
    %c0_76 = arith.constant 0 : index
    %112 = vector.load %arg8[%111, %c7_75, %c0_76] : memref<18x32x128xf32, #tpu.memory_space<vmem>>, vector<8x16x128xf32>
    %113 = vector.broadcast %19 : vector<1x1x128xf32> to vector<8x16x128xf32>
    %114 = arith.mulf %112, %113 : vector<8x16x128xf32>
    %115 = arith.addf %109, %114 : vector<8x16x128xf32>
    %c1_i32_77 = arith.constant 1 : i32
    %116 = arith.addi %93, %c1_i32_77 : i32
    %117 = arith.index_cast %116 : i32 to index
    %c8_78 = arith.constant 8 : index
    %c0_79 = arith.constant 0 : index
    %118 = vector.load %arg8[%117, %c8_78, %c0_79] : memref<18x32x128xf32, #tpu.memory_space<vmem>>, vector<8x16x128xf32>
    %119 = vector.broadcast %21 : vector<1x1x128xf32> to vector<8x16x128xf32>
    %120 = arith.mulf %118, %119 : vector<8x16x128xf32>
    %121 = arith.addf %115, %120 : vector<8x16x128xf32>
    %c1_i32_80 = arith.constant 1 : i32
    %122 = arith.addi %93, %c1_i32_80 : i32
    %123 = arith.index_cast %122 : i32 to index
    %c9_81 = arith.constant 9 : index
    %c0_82 = arith.constant 0 : index
    %124 = vector.load %arg8[%123, %c9_81, %c0_82] : memref<18x32x128xf32, #tpu.memory_space<vmem>>, vector<8x16x128xf32>
    %125 = vector.broadcast %23 : vector<1x1x128xf32> to vector<8x16x128xf32>
    %126 = arith.mulf %124, %125 : vector<8x16x128xf32>
    %127 = arith.addf %121, %126 : vector<8x16x128xf32>
    %c2_i32_83 = arith.constant 2 : i32
    %128 = arith.addi %93, %c2_i32_83 : i32
    %129 = arith.index_cast %128 : i32 to index
    %c7_84 = arith.constant 7 : index
    %c0_85 = arith.constant 0 : index
    %130 = vector.load %arg8[%129, %c7_84, %c0_85] : memref<18x32x128xf32, #tpu.memory_space<vmem>>, vector<8x16x128xf32>
    %131 = vector.broadcast %25 : vector<1x1x128xf32> to vector<8x16x128xf32>
    %132 = arith.mulf %130, %131 : vector<8x16x128xf32>
    %133 = arith.addf %127, %132 : vector<8x16x128xf32>
    %c2_i32_86 = arith.constant 2 : i32
    %134 = arith.addi %93, %c2_i32_86 : i32
    %135 = arith.index_cast %134 : i32 to index
    %c8_87 = arith.constant 8 : index
    %c0_88 = arith.constant 0 : index
    %136 = vector.load %arg8[%135, %c8_87, %c0_88] : memref<18x32x128xf32, #tpu.memory_space<vmem>>, vector<8x16x128xf32>
    %137 = vector.broadcast %27 : vector<1x1x128xf32> to vector<8x16x128xf32>
    %138 = arith.mulf %136, %137 : vector<8x16x128xf32>
    %139 = arith.addf %133, %138 : vector<8x16x128xf32>
    %c2_i32_89 = arith.constant 2 : i32
    %140 = arith.addi %93, %c2_i32_89 : i32
    %141 = arith.index_cast %140 : i32 to index
    %c9_90 = arith.constant 9 : index
    %c0_91 = arith.constant 0 : index
    %142 = vector.load %arg8[%141, %c9_90, %c0_91] : memref<18x32x128xf32, #tpu.memory_space<vmem>>, vector<8x16x128xf32>
    %143 = vector.broadcast %29 : vector<1x1x128xf32> to vector<8x16x128xf32>
    %144 = arith.mulf %142, %143 : vector<8x16x128xf32>
    %145 = arith.addf %139, %144 : vector<8x16x128xf32>
    %146 = vector.broadcast %31 : vector<1x1x128xf32> to vector<8x16x128xf32>
    %147 = arith.addf %145, %146 : vector<8x16x128xf32>
    %c0_92 = arith.constant 0 : index
    %148 = arith.index_cast %93 : i32 to index
    %c0_93 = arith.constant 0 : index
    %c0_94 = arith.constant 0 : index
    %149 = vector.load %arg7[%c0_92, %148, %c0_93, %c0_94] : memref<1x16x16x128xf32, #tpu.memory_space<vmem>>, vector<1x8x16x128xf32>
    %150 = vector.shape_cast %149 : vector<1x8x16x128xf32> to vector<8x16x128xf32>
    %151 = vector.shape_cast %147 : vector<8x16x128xf32> to vector<1x8x16x128xf32>
    tpu.vector_store %arg7[%c0_92, %148, %c0_93, %c0_94], %151 {strides = array<i32>} : memref<1x16x16x128xf32, #tpu.memory_space<vmem>>, vector<1x8x16x128xf32>,
    %c2_i32_95 = arith.constant 2 : i32
    return
  }
  func.func @transform_0(%arg0: i32, %arg1: i32, %arg2: i32) -> (i32, i32, i32, i32) {
    %c0_i32 = arith.constant 0 : i32
    %c0_i32_0 = arith.constant 0 : i32
    return %arg0, %arg2, %c0_i32, %arg1 : i32, i32, i32, i32
  }
  func.func @transform_1(%arg0: i32, %arg1: i32, %arg2: i32) -> (i32, i32, i32, i32, i32) {
    %c0_i32 = arith.constant 0 : i32
    %c0_i32_0 = arith.constant 0 : i32
    %c0_i32_1 = arith.constant 0 : i32
    return %arg0, %arg2, %c0_i32, %c0_i32_0, %arg1 : i32, i32, i32, i32, i32
  }
  func.func @transform_2(%arg0: i32, %arg1: i32, %arg2: i32) -> (i32, i32) {
    %c0_i32 = arith.constant 0 : i32
    %c0_i32_0 = arith.constant 0 : i32
    return %c0_i32, %arg1 : i32, i32
  }
  func.func @transform_3(%arg0: i32, %arg1: i32, %arg2: i32) -> (i32, i32) {
    %c0_i32 = arith.constant 0 : i32
    %c0_i32_0 = arith.constant 0 : i32
    return %c0_i32, %arg1 : i32, i32
  }
  func.func @transform_4(%arg0: i32, %arg1: i32, %arg2: i32) -> (i32, i32, i32, i32) {
    %c0_i32 = arith.constant 0 : i32
    %c0_i32_0 = arith.constant 0 : i32
    return %arg0, %arg2, %c0_i32, %arg1 : i32, i32, i32, i32
  }
}

</mosaic_0001>

<llo_original>
// kernel: tpu_custom_call.1
$region0: #{tpu_custom_call.1}
  #allocation0 [shape = 'u32[]', space=smem, size = 0x4, offset = 0x4, fixed_abs, tag = 'smem constant byte address 0x4 - core index']
  #allocation1 [shape = 'u32[144,128]{1,0:T(1,128)}', space=vmem, size = 0x12000, scoped, tag = 'internal scratch']
  #allocation2 [shape = 'f32[18,32,128]{2,1,0:T(8,128)}', space=vmem, size = 0x48000, scoped, tag = 'scratch operand']
  %s0 = inlined_call_operand.hbm [shape: f32[2,16,16,128], index: 0, kind: input, shape index: {}]
  %s1 = inlined_call_operand.hbm [shape: f32[2,1,2,16,128], index: 1, kind: input, shape index: {}]
  %s2 = inlined_call_operand.hbm [shape: f32[9,128], index: 2, kind: input, shape index: {}]
  %s3 = inlined_call_operand.vmem [shape: f32[1,128], index: 3, kind: input, shape index: {}]
  %s4 = inlined_call_operand.hbm [shape: f32[2,16,16,128], index: 4, kind: output, shape index: {}]
  %s5 = sld [smem:[#allocation0]]
  $region61: #{tpu_custom_call.1} parent=0
    _
  %s7 = ssub.s32 1, %s5
  %s8 = scalar_select 0, %s7, %s5
  $region1: #{tpu_custom_call.1} parent=0
    #allocation3 [shape = 'u8[262144]{0}', space=vmem, size = 0x40000, scoped, tag = 'input window, operand 0']
    #allocation4 [shape = 's32[2]{0}', space=sflag, size = 0x8, scoped, tag = 'scoped memory for tpu_custom_call.1']
    #allocation5 [shape = 's32[2]{0}', space=sflag, size = 0x8, scoped, tag = 'scoped memory for tpu_custom_call.1']
    #allocation6 [shape = 'u8[32768]{0}', space=vmem, size = 0x8000, scoped, tag = 'input window, operand 1']
    #allocation7 [shape = 's32[2]{0}', space=sflag, size = 0x8, scoped, tag = 'scoped memory for tpu_custom_call.1']
    #allocation8 [shape = 'u8[8192]{0}', space=vmem, size = 0x2000, scoped, tag = 'input window, operand 2, single buffered']
    #allocation9 [shape = 'u8[262144]{0}', space=vmem, size = 0x40000, scoped, tag = 'output window, operand 0']
    %9 = vsyncpa [#allocation4], 0
    %s10 = scalar_lea.sflag [#allocation4], 1
    %11 = vsyncpa %s10, 0
    %12 = vsyncpa [#allocation7], 0
    %s13 = scalar_lea.sflag [#allocation7], 1
    %14 = vsyncpa %s13, 0
    %15 = vsyncpa [#allocation5], 0
    %s16 = scalar_lea.sflag [#allocation5], 1
    %17 = vsyncpa %s16, 0
    loop: start=0, step=1, limit=4
    $region2: #{tpu_custom_call.1} parent=1 // loop_pre_header
      _
    $region3: #{tpu_custom_call.1} parent=1 // loop_header
      %s19 = sphi 0, %s23
      %p20 = scmp.ge.s32.totalorder %s19, 4
      %s26 = sphi 0, %s45
      %s27 = sphi 0, %s41
      %s28 = sphi 0, %s37
      %s29 = sphi 0, %s26
      %s30 = sphi 0, %s27
      %s31 = sphi 0, %s28
      %s32 = sphi 0, %s29
      %s33 = sphi 0, %s30
      %s34 = sphi 0, %s31
      %s52 = sphi 0, %s54
      %s55 = sphi 0, %s52
      %s56 = sphi 0, %s55
      %s72 = sphi 0, %s56
      %s82 = sphi 0, %s84
      %s85 = sphi 0, %s82
      %s86 = sphi 0, %s85
      %s102 = sphi 0, %s86
      %s108 = sphi 0, %s110
      %s111 = sphi 0, %s108
      %s112 = sphi 0, %s111
      %s128 = sphi 0, %s112
      %s134 = sphi 0, %s136
      %s137 = sphi 0, %s134
      %s138 = sphi 0, %s137
      %s154 = sphi 0, %s138
      %s164 = sphi 0, %s166
      %s167 = sphi 0, %s164
      %s168 = sphi 0, %s167
      %s184 = sphi 0, %s168
    $region4: #{tpu_custom_call.1} parent=1 // loop_header_branch
      %22 = sbr.rel (%p20) target = $region8
    $region5: #{tpu_custom_call.1} parent=1 // loop_body
      %s24 = ssub.s32 %s19, 1
      %s25 = ssub.s32 %s19, 2
      %s35 = sadd.s32 1, %s28
      %p36 = scmp.ge.s32.totalorder %s35, 1
      %s37 = scalar_select %p36, 0, %s35
      %s38 = sadd.s32 1, %s27
      %s39 = scalar_select %p36, %s38, %s27
      %p40 = scmp.ge.s32.totalorder %s39, 1
      %s41 = scalar_select %p40, 0, %s39
      %s42 = sadd.s32 1, %s26
      %s43 = scalar_select %p40, %s42, %s26
      %p44 = scmp.ge.s32.totalorder %s43, 2
      %s45 = scalar_select %p44, 0, %s43
      %s46 = ssub.s32 %s26, %s45
      %s47 = ssub.s32 %s28, %s37
      %s48 = sor.u32 %s46, %s47
      %s49 = ssub.s32 %s27, %s41
      %s50 = sor.u32 %s48, %s49
      %p51 = scmp.eq.s32.totalorder %s50, 0
      %s53 = sadd.s32 %s52, 1
      %s54 = scalar_select %p51, %s52, %s53
      %p57 = pneg %p51
      %p58 = scmp.eq.s32.totalorder %s19, 1
      %p59 = por %p57, %p58
      %p60 = scmp.ne.s32.totalorder %s52, %s55
      %p61 = scmp.eq.s32.totalorder %s19, 0
      %p62 = por %p60, %p61
      %p63 = scmp.ne.s32.totalorder %s52, %s55
      %p64 = scmp.eq.s32.totalorder %s24, 1
      %p65 = por %p63, %p64
      %p66 = scmp.ne.s32.totalorder %s55, %s56
      %p67 = scmp.eq.s32.totalorder %s24, 0
      %p68 = por %p66, %p67
      %p69 = scmp.ne.s32.totalorder %s55, %s56
      %p70 = scmp.eq.s32.totalorder %s25, 1
      %p71 = por %p69, %p70
      %p73 = scmp.ne.s32.totalorder %s56, %s72
      %p74 = scmp.eq.s32.totalorder %s25, 0
      %p75 = por %p73, %p74
      %s76 = ssub.s32 %s26, %s45
      %s77 = ssub.s32 %s28, %s37
      %s78 = sor.u32 %s76, %s77
      %s79 = ssub.s32 %s27, %s41
      %s80 = sor.u32 %s78, %s79
      %p81 = scmp.eq.s32.totalorder %s80, 0
      %s83 = sadd.s32 %s82, 1
      %s84 = scalar_select %p81, %s82, %s83
      %p87 = pneg %p81
      %p88 = scmp.eq.s32.totalorder %s19, 1
      %p89 = por %p87, %p88
      %p90 = scmp.ne.s32.totalorder %s82, %s85
      %p91 = scmp.eq.s32.totalorder %s19, 0
      %p92 = por %p90, %p91
      %p93 = scmp.ne.s32.totalorder %s82, %s85
      %p94 = scmp.eq.s32.totalorder %s24, 1
      %p95 = por %p93, %p94
      %p96 = scmp.ne.s32.totalorder %s85, %s86
      %p97 = scmp.eq.s32.totalorder %s24, 0
      %p98 = por %p96, %p97
      %p99 = scmp.ne.s32.totalorder %s85, %s86
      %p100 = scmp.eq.s32.totalorder %s25, 1
      %p101 = por %p99, %p100
      %p103 = scmp.ne.s32.totalorder %s86, %s102
      %p104 = scmp.eq.s32.totalorder %s25, 0
      %p105 = por %p103, %p104
      %s106 = ssub.s32 %s27, %s41
      %p107 = scmp.eq.s32.totalorder %s106, 0
      %s109 = sadd.s32 %s108, 1
      %s110 = scalar_select %p107, %s108, %s109
      %p113 = pneg %p107
      %p114 = scmp.eq.s32.totalorder %s19, 1
      %p115 = por %p113, %p114
      %p116 = scmp.ne.s32.totalorder %s108, %s111
      %p117 = scmp.eq.s32.totalorder %s19, 0
      %p118 = por %p116, %p117
      %p119 = scmp.ne.s32.totalorder %s108, %s111
      %p120 = scmp.eq.s32.totalorder %s24, 1
      %p121 = por %p119, %p120
      %p122 = scmp.ne.s32.totalorder %s111, %s112
      %p123 = scmp.eq.s32.totalorder %s24, 0
      %p124 = por %p122, %p123
      %p125 = scmp.ne.s32.totalorder %s111, %s112
      %p126 = scmp.eq.s32.totalorder %s25, 1
      %p127 = por %p125, %p126
      %p129 = scmp.ne.s32.totalorder %s112, %s128
      %p130 = scmp.eq.s32.totalorder %s25, 0
      %p131 = por %p129, %p130
      %s132 = ssub.s32 %s27, %s41
      %p133 = scmp.eq.s32.totalorder %s132, 0
      %s135 = sadd.s32 %s134, 1
      %s136 = scalar_select %p133, %s134, %s135
      %p139 = pneg %p133
      %p140 = scmp.eq.s32.totalorder %s19, 1
      %p141 = por %p139, %p140
      %p142 = scmp.ne.s32.totalorder %s134, %s137
      %p143 = scmp.eq.s32.totalorder %s19, 0
      %p144 = por %p142, %p143
      %p145 = scmp.ne.s32.totalorder %s134, %s137
      %p146 = scmp.eq.s32.totalorder %s24, 1
      %p147 = por %p145, %p146
      %p148 = scmp.ne.s32.totalorder %s137, %s138
      %p149 = scmp.eq.s32.totalorder %s24, 0
      %p150 = por %p148, %p149
      %p151 = scmp.ne.s32.totalorder %s137, %s138
      %p152 = scmp.eq.s32.totalorder %s25, 1
      %p153 = por %p151, %p152
      %p155 = scmp.ne.s32.totalorder %s138, %s154
      %p156 = scmp.eq.s32.totalorder %s25, 0
      %p157 = por %p155, %p156
      %s158 = ssub.s32 %s26, %s45
      %s159 = ssub.s32 %s28, %s37
      %s160 = sor.u32 %s158, %s159
      %s161 = ssub.s32 %s27, %s41
      %s162 = sor.u32 %s160, %s161
      %p163 = scmp.eq.s32.totalorder %s162, 0
      %s165 = sadd.s32 %s164, 1
      %s166 = scalar_select %p163, %s164, %s165
      %p169 = pneg %p163
      %p170 = scmp.eq.s32.totalorder %s19, 1
      %p171 = por %p169, %p170
      %p172 = scmp.ne.s32.totalorder %s164, %s167
      %p173 = scmp.eq.s32.totalorder %s19, 0
      %p174 = por %p172, %p173
      %p175 = scmp.ne.s32.totalorder %s164, %s167
      %p176 = scmp.eq.s32.totalorder %s24, 1
      %p177 = por %p175, %p176
      %p178 = scmp.ne.s32.totalorder %s167, %s168
      %p179 = scmp.eq.s32.totalorder %s24, 0
      %p180 = por %p178, %p179
      %p181 = scmp.ne.s32.totalorder %s167, %s168
      %p182 = scmp.eq.s32.totalorder %s25, 1
      %p183 = por %p181, %p182
      %p185 = scmp.ne.s32.totalorder %s168, %s184
      %p186 = scmp.eq.s32.totalorder %s25, 0
      %p187 = por %p185, %p186
      %p188 = scmp.le.s32.totalorder 1, %s19
      %p189 = scmp.lt.s32.totalorder %s19, 3
      %p190 = pnand %p188, %p189
      %p191 = pneg %p190
      // Predicated region
      $region9: #{tpu_custom_call.1} parent=5 // pred_check
        _
      $region10: #{tpu_custom_call.1} parent=5 // pred_check_branch
        %193 = sbr.rel (%p190) target = $region12
      $region11: #{tpu_custom_call.1} parent=5 // pred_region
        %s194 = ssub.s32 %s19, 1
        // Predicated region
        $region13: #{tpu_custom_call.1} parent=11 // pred_check
          %p195 = pneg %p124
        $region14: #{tpu_custom_call.1} parent=11 // pred_check_branch
          %197 = sbr.rel (%p195) target = $region16
        $region15: #{tpu_custom_call.1} parent=11 // pred_region
          %s199 = ssub.s32 256, 256
          %200 = vsyncadd [#allocation7], %s199
          %s201 = smul.addr %s30, 128
          %s202 = scalar_lea.hbm %s2, %s201
          %s203 = sshll.u32 [#allocation8], 4
          %s204 = int_to_ptr.vmem [resolvable:$true] %s203
          %209 = dma.hbm_to_vmem [thread:$0]  %s202, 256, %s204, [#allocation7], 128, 128, 8
        $region16: #{tpu_custom_call.1} parent=11 // pred_fallthru
          _
        // Predicated region
        $region17: #{tpu_custom_call.1} parent=11 // pred_check
          %p210 = pneg %p150
        $region18: #{tpu_custom_call.1} parent=11 // pred_check_branch
          %212 = sbr.rel (%p210) target = $region20
        $region19: #{tpu_custom_call.1} parent=11 // pred_region
          %p213 = scmp.lt.s32.totalorder %s30, 0
          %s214 = scalar_select %p213, %s30, 0
          %s215 = scalar_lea.vmem %s3, %s214
        $region20: #{tpu_custom_call.1} parent=11 // pred_fallthru
          _
      $region12: #{tpu_custom_call.1} parent=5 // pred_fallthru
        _
      %p216 = scmp.lt.s32.totalorder %s19, 2
      // Predicated region
      $region21: #{tpu_custom_call.1} parent=5 // pred_check
        %p217 = pneg %p216
      $region22: #{tpu_custom_call.1} parent=5 // pred_check_branch
        %219 = sbr.rel (%p217) target = $region24
      $region23: #{tpu_custom_call.1} parent=5 // pred_region
        // Predicated region
        $region25: #{tpu_custom_call.1} parent=23 // pred_check
          %p220 = pneg %p62
        $region26: #{tpu_custom_call.1} parent=23 // pred_check_branch
          %222 = sbr.rel (%p220) target = $region28
        $region27: #{tpu_custom_call.1} parent=23 // pred_region
          %s223 = sand.u32 %s52, 1
          %s224 = scalar_lea.sflag [#allocation4], %s223
          %s225 = sand.u32 %s52, 1
          %s226 = smul.addr %s225, 256
          %s227 = scalar_lea.vmem [#allocation3], %s226
          %s228 = smul.u32 16, %s28
          %s230 = ssub.s32 4096, 4096
          %231 = vsyncadd %s224, %s230
          %s232 = smul.addr %s228, 2
          %s233 = sadd.s32 %s27, %s232
          %s234 = smul.addr %s26, 32
          %s235 = sadd.s32 %s233, %s234
          %s236 = smul.addr %s235, 128
          %s237 = scalar_lea.hbm %s0, %s236
          %s238 = sshll.u32 %s227, 4
          %s239 = int_to_ptr.vmem [resolvable:$true] %s238
          %244 = dma.hbm_to_vmem [thread:$0]  %s237, 4096, %s239, %s224, 128, 128, 8
        $region28: #{tpu_custom_call.1} parent=23 // pred_fallthru
          _
        // Predicated region
        $region29: #{tpu_custom_call.1} parent=23 // pred_check
          %p245 = pneg %p92
        $region30: #{tpu_custom_call.1} parent=23 // pred_check_branch
          %247 = sbr.rel (%p245) target = $region32
        $region31: #{tpu_custom_call.1} parent=23 // pred_region
          %s248 = sand.u32 %s19, 1
          %s249 = scalar_lea.sflag [#allocation7], %s248
          %s250 = sand.u32 %s82, 1
          %s251 = smul.addr %s250, 32
          %s252 = scalar_lea.vmem [#allocation6], %s251
          %s254 = ssub.s32 512, 512
          %255 = vsyncadd %s249, %s254
          %s256 = smul.addr %s28, 4
          %s257 = sadd.s32 %s27, %s256
          %s258 = smul.addr %s26, 4
          %s259 = sadd.s32 %s257, %s258
          %s260 = smul.addr %s259, 128
          %s261 = scalar_lea.hbm %s1, %s260
          %s262 = sshll.u32 %s252, 4
          %s263 = int_to_ptr.vmem [resolvable:$true] %s262
          %268 = dma.hbm_to_vmem [thread:$0]  %s261, 512, %s263, %s249, 128, 128, 8
        $region32: #{tpu_custom_call.1} parent=23 // pred_fallthru
          _
      $region24: #{tpu_custom_call.1} parent=5 // pred_fallthru
        _
      %p269 = scmp.le.s32.totalorder 1, %s19
      %p270 = scmp.lt.s32.totalorder %s19, 3
      %p271 = pnand %p269, %p270
      %p272 = pneg %p271
      // Predicated region
      $region33: #{tpu_custom_call.1} parent=5 // pred_check
        _
      $region34: #{tpu_custom_call.1} parent=5 // pred_check_branch
        %274 = sbr.rel (%p271) target = $region36
      $region35: #{tpu_custom_call.1} parent=5 // pred_region
        %s275 = ssub.s32 %s19, 1
        %s276 = sand.u32 %s55, 1
        %s277 = scalar_lea.sflag [#allocation4], %s276
        %s278 = sand.u32 %s55, 1
        %s279 = smul.addr %s278, 256
        %s280 = scalar_lea.vmem [#allocation3], %s279
        // Predicated region
        $region37: #{tpu_custom_call.1} parent=35 // pred_check
          %p281 = pneg %p68
        $region38: #{tpu_custom_call.1} parent=35 // pred_check_branch
          %283 = sbr.rel (%p281) target = $region40
        $region39: #{tpu_custom_call.1} parent=35 // pred_region
          %284 = dma.done %s277, 4096
        $region40: #{tpu_custom_call.1} parent=35 // pred_fallthru
          _
        %s285 = sand.u32 %s24, 1
        %s286 = scalar_lea.sflag [#allocation7], %s285
        %s287 = sand.u32 %s85, 1
        %s288 = smul.addr %s287, 32
        %s289 = scalar_lea.vmem [#allocation6], %s288
        // Predicated region
        $region41: #{tpu_custom_call.1} parent=35 // pred_check
          %p290 = pneg %p98
        $region42: #{tpu_custom_call.1} parent=35 // pred_check_branch
          %292 = sbr.rel (%p290) target = $region44
        $region43: #{tpu_custom_call.1} parent=35 // pred_region
          %293 = dma.done %s286, 512
        $region44: #{tpu_custom_call.1} parent=35 // pred_fallthru
          _
        // Predicated region
        $region45: #{tpu_custom_call.1} parent=35 // pred_check
          %p294 = pneg %p124
        $region46: #{tpu_custom_call.1} parent=35 // pred_check_branch
          %296 = sbr.rel (%p294) target = $region48
        $region47: #{tpu_custom_call.1} parent=35 // pred_region
          %297 = dma.done [#allocation7], 256
        $region48: #{tpu_custom_call.1} parent=35 // pred_fallthru
          _
        %s298 = sand.u32 %s55, 1
        %s299 = scalar_lea.sflag [#allocation4], %s298
        %s300 = sand.u32 %s55, 1
        %s301 = smul.addr %s300, 256
        %s302 = scalar_lea.vmem [#allocation3], %s301
        %p303 = pneg %p68
        %p304 = pneg %p65
        %s305 = sand.u32 %s24, 1
        %s306 = scalar_lea.sflag [#allocation7], %s305
        %s307 = sand.u32 %s85, 1
        %s308 = smul.addr %s307, 32
        %s309 = scalar_lea.vmem [#allocation6], %s308
        %p310 = pneg %p98
        %p311 = pneg %p95
        %p312 = pneg %p124
        %p313 = pneg %p121
        %p314 = scmp.lt.s32.totalorder %s30, 0
        %s315 = scalar_select %p314, %s30, 0
        %s316 = scalar_lea.vmem %s3, %s315
        %p317 = pneg %p150
        %p318 = pneg %p147
        %p319 = pneg %p180
        %p320 = pneg %p177
        %s321 = sand.u32 %s167, 1
        %s322 = scalar_lea.sflag [#allocation5], %s321
        %s323 = sand.u32 %s167, 1
        %s324 = smul.addr %s323, 256
        %s325 = scalar_lea.vmem [#allocation9], %s324
        %s326 = smul.u32 16, %s31
        %p327 = scmp.lt.s32.totalorder %s30, 0
        %s328 = scalar_select %p327, %s30, 0
        %s329 = scalar_lea.vmem %s3, %s328
        %s330 = smul.u32 16, %s31
        %331 = vst [vmem:[#allocation2 + $0x7] sm:$0x1] 0.0
        %332 = vst [vmem:[#allocation2 + $0x27] sm:$0x1] 0.0
        %333 = vst [vmem:[#allocation2 + $0x47] sm:$0x1] 0.0
        %334 = vst [vmem:[#allocation2 + $0x67] sm:$0x1] 0.0
        %335 = vst [vmem:[#allocation2 + $0x87] sm:$0x1] 0.0
        %336 = vst [vmem:[#allocation2 + $0xa7] sm:$0x1] 0.0
        %337 = vst [vmem:[#allocation2 + $0xc7] sm:$0x1] 0.0
        %338 = vst [vmem:[#allocation2 + $0xe7] sm:$0x1] 0.0
        %339 = vst [vmem:[#allocation2 + $0x107] sm:$0x1] 0.0
        %340 = vst [vmem:[#allocation2 + $0x127] sm:$0x1] 0.0
        %341 = vst [vmem:[#allocation2 + $0x147] sm:$0x1] 0.0
        %342 = vst [vmem:[#allocation2 + $0x167] sm:$0x1] 0.0
        %343 = vst [vmem:[#allocation2 + $0x187] sm:$0x1] 0.0
        %344 = vst [vmem:[#allocation2 + $0x1a7] sm:$0x1] 0.0
        %345 = vst [vmem:[#allocation2 + $0x1c7] sm:$0x1] 0.0
        %346 = vst [vmem:[#allocation2 + $0x1e7] sm:$0x1] 0.0
        %347 = vst [vmem:[#allocation2 + $0x207] sm:$0x1] 0.0
        %348 = vst [vmem:[#allocation2 + $0x227] sm:$0x1] 0.0
        %349 = vst [vmem:[#allocation2 + $0x18] sm:$0x1] 0.0
        %350 = vst [vmem:[#allocation2 + $0x38] sm:$0x1] 0.0
        %351 = vst [vmem:[#allocation2 + $0x58] sm:$0x1] 0.0
        %352 = vst [vmem:[#allocation2 + $0x78] sm:$0x1] 0.0
        %353 = vst [vmem:[#allocation2 + $0x98] sm:$0x1] 0.0
        %354 = vst [vmem:[#allocation2 + $0xb8] sm:$0x1] 0.0
        %355 = vst [vmem:[#allocation2 + $0xd8] sm:$0x1] 0.0
        %356 = vst [vmem:[#allocation2 + $0xf8] sm:$0x1] 0.0
        %357 = vst [vmem:[#allocation2 + $0x118] sm:$0x1] 0.0
        %358 = vst [vmem:[#allocation2 + $0x138] sm:$0x1] 0.0
        %359 = vst [vmem:[#allocation2 + $0x158] sm:$0x1] 0.0
        %360 = vst [vmem:[#allocation2 + $0x178] sm:$0x1] 0.0
        %361 = vst [vmem:[#allocation2 + $0x198] sm:$0x1] 0.0
        %362 = vst [vmem:[#allocation2 + $0x1b8] sm:$0x1] 0.0
        %363 = vst [vmem:[#allocation2 + $0x1d8] sm:$0x1] 0.0
        %364 = vst [vmem:[#allocation2 + $0x1f8] sm:$0x1] 0.0
        %365 = vst [vmem:[#allocation2 + $0x218] sm:$0x1] 0.0
        %366 = vst [vmem:[#allocation2 + $0x238] sm:$0x1] 0.0
        %v367 = vld [vmem:[%s289] sm:$0xff]
        %v368 = vld [vmem:[%s289 + $0x8] sm:$0xff]
        %369 = vst [vmem:[#allocation2 + $0x8] sm:$0xff] %v367
        %370 = vst [vmem:[#allocation2 + $0x10] sm:$0xff] %v368
        %s371 = scalar_lea.vmem %s289, 16 [#allocation6]
        %v372 = vld [vmem:[%s371] sm:$0xff]
        %v373 = vld [vmem:[%s371 + $0x8] sm:$0xff]
        %s374 = scalar_lea.vmem [#allocation2], 544
        %375 = vst [vmem:[%s374 + $0x8] sm:$0xff] %v372
        %376 = vst [vmem:[%s374 + $0x10] sm:$0xff] %v373
        %v377 = vld [vmem:[%s280] sm:$0xff]
        %v378 = vld [vmem:[%s280 + $0x8] sm:$0xff]
        %v379 = vld [vmem:[%s280 + $0x10] sm:$0xff]
        %v380 = vld [vmem:[%s280 + $0x18] sm:$0xff]
        %v381 = vld [vmem:[%s280 + $0x20] sm:$0xff]
        %v382 = vld [vmem:[%s280 + $0x28] sm:$0xff]
        %v383 = vld [vmem:[%s280 + $0x30] sm:$0xff]
        %v384 = vld [vmem:[%s280 + $0x38] sm:$0xff]
        %v385 = vld [vmem:[%s280 + $0x40] sm:$0xff]
        %v386 = vld [vmem:[%s280 + $0x48] sm:$0xff]
        %v387 = vld [vmem:[%s280 + $0x50] sm:$0xff]
        %v388 = vld [vmem:[%s280 + $0x58] sm:$0xff]
        %v389 = vld [vmem:[%s280 + $0x60] sm:$0xff]
        %v390 = vld [vmem:[%s280 + $0x68] sm:$0xff]
        %v391 = vld [vmem:[%s280 + $0x70] sm:$0xff]
        %v392 = vld [vmem:[%s280 + $0x78] sm:$0xff]
        %v393 = vld [vmem:[%s280 + $0x80] sm:$0xff]
        %v394 = vld [vmem:[%s280 + $0x88] sm:$0xff]
        %v395 = vld [vmem:[%s280 + $0x90] sm:$0xff]
        %v396 = vld [vmem:[%s280 + $0x98] sm:$0xff]
        %v397 = vld [vmem:[%s280 + $0xa0] sm:$0xff]
        %v398 = vld [vmem:[%s280 + $0xa8] sm:$0xff]
        %v399 = vld [vmem:[%s280 + $0xb0] sm:$0xff]
        %v400 = vld [vmem:[%s280 + $0xb8] sm:$0xff]
        %v401 = vld [vmem:[%s280 + $0xc0] sm:$0xff]
        %v402 = vld [vmem:[%s280 + $0xc8] sm:$0xff]
        %v403 = vld [vmem:[%s280 + $0xd0] sm:$0xff]
        %v404 = vld [vmem:[%s280 + $0xd8] sm:$0xff]
        %v405 = vld [vmem:[%s280 + $0xe0] sm:$0xff]
        %v406 = vld [vmem:[%s280 + $0xe8] sm:$0xff]
        %v407 = vld [vmem:[%s280 + $0xf0] sm:$0xff]
        %v408 = vld [vmem:[%s280 + $0xf8] sm:$0xff]
        %s409 = scalar_lea.vmem [#allocation2], 32
        %410 = vst [vmem:[%s409 + $0x8] sm:$0xff] %v377
        %411 = vst [vmem:[%s409 + $0x10] sm:$0xff] %v378
        %412 = vst [vmem:[%s409 + $0x28] sm:$0xff] %v379
        %413 = vst [vmem:[%s409 + $0x30] sm:$0xff] %v380
        %414 = vst [vmem:[%s409 + $0x48] sm:$0xff] %v381
        %415 = vst [vmem:[%s409 + $0x50] sm:$0xff] %v382
        %416 = vst [vmem:[%s409 + $0x68] sm:$0xff] %v383
        %417 = vst [vmem:[%s409 + $0x70] sm:$0xff] %v384
        %418 = vst [vmem:[%s409 + $0x88] sm:$0xff] %v385
        %419 = vst [vmem:[%s409 + $0x90] sm:$0xff] %v386
        %420 = vst [vmem:[%s409 + $0xa8] sm:$0xff] %v387
        %421 = vst [vmem:[%s409 + $0xb0] sm:$0xff] %v388
        %422 = vst [vmem:[%s409 + $0xc8] sm:$0xff] %v389
        %423 = vst [vmem:[%s409 + $0xd0] sm:$0xff] %v390
        %424 = vst [vmem:[%s409 + $0xe8] sm:$0xff] %v391
        %425 = vst [vmem:[%s409 + $0xf0] sm:$0xff] %v392
        %426 = vst [vmem:[%s409 + $0x108] sm:$0xff] %v393
        %427 = vst [vmem:[%s409 + $0x110] sm:$0xff] %v394
        %428 = vst [vmem:[%s409 + $0x128] sm:$0xff] %v395
        %429 = vst [vmem:[%s409 + $0x130] sm:$0xff] %v396
        %430 = vst [vmem:[%s409 + $0x148] sm:$0xff] %v397
        %431 = vst [vmem:[%s409 + $0x150] sm:$0xff] %v398
        %432 = vst [vmem:[%s409 + $0x168] sm:$0xff] %v399
        %433 = vst [vmem:[%s409 + $0x170] sm:$0xff] %v400
        %434 = vst [vmem:[%s409 + $0x188] sm:$0xff] %v401
        %435 = vst [vmem:[%s409 + $0x190] sm:$0xff] %v402
        %436 = vst [vmem:[%s409 + $0x1a8] sm:$0xff] %v403
        %437 = vst [vmem:[%s409 + $0x1b0] sm:$0xff] %v404
        %438 = vst [vmem:[%s409 + $0x1c8] sm:$0xff] %v405
        %439 = vst [vmem:[%s409 + $0x1d0] sm:$0xff] %v406
        %440 = vst [vmem:[%s409 + $0x1e8] sm:$0xff] %v407
        %441 = vst [vmem:[%s409 + $0x1f0] sm:$0xff] %v408
        %v442 = vld [vmem:[#allocation8] sm:$0x1]
        %v443 = vld [vmem:[#allocation8 + $0x1] sm:$0x1]
        %v444 = vld [vmem:[#allocation8 + $0x2] sm:$0x1]
        %v445 = vld [vmem:[#allocation8 + $0x3] sm:$0x1]
        %v446 = vld [vmem:[#allocation8 + $0x4] sm:$0x1]
        %v447 = vld [vmem:[#allocation8 + $0x5] sm:$0x1]
        %v448 = vld [vmem:[#allocation8 + $0x6] sm:$0x1]
        %v449 = vld [vmem:[#allocation8 + $0x7] sm:$0x1]
        %v450 = vld [vmem:[#allocation8 + $0x8] sm:$0x1]
        %v451 = vld [vmem:[%s329] sm:$0x1]
        %s452 = smul.u32 0, 32
        %s453 = scalar_lea.vmem [#allocation2], %s452
        %v454 = vld [vmem:[%s453 + $0x7] sm:$0xff]
        %v455 = vld [vmem:[%s453 + $0xf] sm:$0xff]
        %v456 = vld [vmem:[%s453 + $0x27] sm:$0xff]
        %v457 = vld [vmem:[%s453 + $0x2f] sm:$0xff]
        %v458 = vld [vmem:[%s453 + $0x47] sm:$0xff]
        %v459 = vld [vmem:[%s453 + $0x4f] sm:$0xff]
        %v460 = vld [vmem:[%s453 + $0x67] sm:$0xff]
        %v461 = vld [vmem:[%s453 + $0x6f] sm:$0xff]
        %v462 = vld [vmem:[%s453 + $0x87] sm:$0xff]
        %v463 = vld [vmem:[%s453 + $0x8f] sm:$0xff]
        %v464 = vld [vmem:[%s453 + $0xa7] sm:$0xff]
        %v465 = vld [vmem:[%s453 + $0xaf] sm:$0xff]
        %v466 = vld [vmem:[%s453 + $0xc7] sm:$0xff]
        %v467 = vld [vmem:[%s453 + $0xcf] sm:$0xff]
        %v468 = vld [vmem:[%s453 + $0xe7] sm:$0xff]
        %v469 = vld [vmem:[%s453 + $0xef] sm:$0xff]
        %v470 = vlaneseq
        %v471 = vshrl.u32 %v470, 7
        %v472 = vsub.s32 0, %v471
        %v473 = vrot.slane %v442, %v472
        %v474 = vmul.f32 %v454, %v473
        %v475 = vmul.f32 %v455, %v473
        %v476 = vmul.f32 %v456, %v473
        %v477 = vmul.f32 %v457, %v473
        %v478 = vmul.f32 %v458, %v473
        %v479 = vmul.f32 %v459, %v473
        %v480 = vmul.f32 %v460, %v473
        %v481 = vmul.f32 %v461, %v473
        %v482 = vmul.f32 %v462, %v473
        %v483 = vmul.f32 %v463, %v473
        %v484 = vmul.f32 %v464, %v473
        %v485 = vmul.f32 %v465, %v473
        %v486 = vmul.f32 %v466, %v473
        %v487 = vmul.f32 %v467, %v473
        %v488 = vmul.f32 %v468, %v473
        %v489 = vmul.f32 %v469, %v473
        %v490 = vld [vmem:[%s453 + $0x8] sm:$0xff]
        %v491 = vld [vmem:[%s453 + $0x10] sm:$0xff]
        %v492 = vld [vmem:[%s453 + $0x28] sm:$0xff]
        %v493 = vld [vmem:[%s453 + $0x30] sm:$0xff]
        %v494 = vld [vmem:[%s453 + $0x48] sm:$0xff]
        %v495 = vld [vmem:[%s453 + $0x50] sm:$0xff]
        %v496 = vld [vmem:[%s453 + $0x68] sm:$0xff]
        %v497 = vld [vmem:[%s453 + $0x70] sm:$0xff]
        %v498 = vld [vmem:[%s453 + $0x88] sm:$0xff]
        %v499 = vld [vmem:[%s453 + $0x90] sm:$0xff]
        %v500 = vld [vmem:[%s453 + $0xa8] sm:$0xff]
        %v501 = vld [vmem:[%s453 + $0xb0] sm:$0xff]
        %v502 = vld [vmem:[%s453 + $0xc8] sm:$0xff]
        %v503 = vld [vmem:[%s453 + $0xd0] sm:$0xff]
        %v504 = vld [vmem:[%s453 + $0xe8] sm:$0xff]
        %v505 = vld [vmem:[%s453 + $0xf0] sm:$0xff]
        %v506 = vlaneseq
        %v507 = vshrl.u32 %v506, 7
        %v508 = vsub.s32 0, %v507
        %v509 = vrot.slane %v443, %v508
        %v510 = vmul.f32 %v490, %v509
        %v511 = vmul.f32 %v491, %v509
        %v512 = vmul.f32 %v492, %v509
        %v513 = vmul.f32 %v493, %v509
        %v514 = vmul.f32 %v494, %v509
        %v515 = vmul.f32 %v495, %v509
        %v516 = vmul.f32 %v496, %v509
        %v517 = vmul.f32 %v497, %v509
        %v518 = vmul.f32 %v498, %v509
        %v519 = vmul.f32 %v499, %v509
        %v520 = vmul.f32 %v500, %v509
        %v521 = vmul.f32 %v501, %v509
        %v522 = vmul.f32 %v502, %v509
        %v523 = vmul.f32 %v503, %v509
        %v524 = vmul.f32 %v504, %v509
        %v525 = vmul.f32 %v505, %v509
        %v526 = vadd.f32 %v474, %v510
        %v527 = vadd.f32 %v475, %v511
        %v528 = vadd.f32 %v476, %v512
        %v529 = vadd.f32 %v477, %v513
        %v530 = vadd.f32 %v478, %v514
        %v531 = vadd.f32 %v479, %v515
        %v532 = vadd.f32 %v480, %v516
        %v533 = vadd.f32 %v481, %v517
        %v534 = vadd.f32 %v482, %v518
        %v535 = vadd.f32 %v483, %v519
        %v536 = vadd.f32 %v484, %v520
        %v537 = vadd.f32 %v485, %v521
        %v538 = vadd.f32 %v486, %v522
        %v539 = vadd.f32 %v487, %v523
        %v540 = vadd.f32 %v488, %v524
        %v541 = vadd.f32 %v489, %v525
        %v542 = vld [vmem:[%s453 + $0x9] sm:$0xff]
        %v543 = vld [vmem:[%s453 + $0x11] sm:$0xff]
        %v544 = vld [vmem:[%s453 + $0x29] sm:$0xff]
        %v545 = vld [vmem:[%s453 + $0x31] sm:$0xff]
        %v546 = vld [vmem:[%s453 + $0x49] sm:$0xff]
        %v547 = vld [vmem:[%s453 + $0x51] sm:$0xff]
        %v548 = vld [vmem:[%s453 + $0x69] sm:$0xff]
        %v549 = vld [vmem:[%s453 + $0x71] sm:$0xff]
        %v550 = vld [vmem:[%s453 + $0x89] sm:$0xff]
        %v551 = vld [vmem:[%s453 + $0x91] sm:$0xff]
        %v552 = vld [vmem:[%s453 + $0xa9] sm:$0xff]
        %v553 = vld [vmem:[%s453 + $0xb1] sm:$0xff]
        %v554 = vld [vmem:[%s453 + $0xc9] sm:$0xff]
        %v555 = vld [vmem:[%s453 + $0xd1] sm:$0xff]
        %v556 = vld [vmem:[%s453 + $0xe9] sm:$0xff]
        %v557 = vld [vmem:[%s453 + $0xf1] sm:$0xff]
        %v558 = vlaneseq
        %v559 = vshrl.u32 %v558, 7
        %v560 = vsub.s32 0, %v559
        %v561 = vrot.slane %v444, %v560
        %v562 = vmul.f32 %v542, %v561
        %v563 = vmul.f32 %v543, %v561
        %v564 = vmul.f32 %v544, %v561
        %v565 = vmul.f32 %v545, %v561
        %v566 = vmul.f32 %v546, %v561
        %v567 = vmul.f32 %v547, %v561
        %v568 = vmul.f32 %v548, %v561
        %v569 = vmul.f32 %v549, %v561
        %v570 = vmul.f32 %v550, %v561
        %v571 = vmul.f32 %v551, %v561
        %v572 = vmul.f32 %v552, %v561
        %v573 = vmul.f32 %v553, %v561
        %v574 = vmul.f32 %v554, %v561
        %v575 = vmul.f32 %v555, %v561
        %v576 = vmul.f32 %v556, %v561
        %v577 = vmul.f32 %v557, %v561
        %v578 = vadd.f32 %v526, %v562
        %v579 = vadd.f32 %v527, %v563
        %v580 = vadd.f32 %v528, %v564
        %v581 = vadd.f32 %v529, %v565
        %v582 = vadd.f32 %v530, %v566
        %v583 = vadd.f32 %v531, %v567
        %v584 = vadd.f32 %v532, %v568
        %v585 = vadd.f32 %v533, %v569
        %v586 = vadd.f32 %v534, %v570
        %v587 = vadd.f32 %v535, %v571
        %v588 = vadd.f32 %v536, %v572
        %v589 = vadd.f32 %v537, %v573
        %v590 = vadd.f32 %v538, %v574
        %v591 = vadd.f32 %v539, %v575
        %v592 = vadd.f32 %v540, %v576
        %v593 = vadd.f32 %v541, %v577
        %s594 = sadd.s32 0, 1
        %s595 = smul.u32 %s594, 32
        %s596 = scalar_lea.vmem [#allocation2], %s595
        %v597 = vld [vmem:[%s596 + $0x7] sm:$0xff]
        %v598 = vld [vmem:[%s596 + $0xf] sm:$0xff]
        %v599 = vld [vmem:[%s596 + $0x27] sm:$0xff]
        %v600 = vld [vmem:[%s596 + $0x2f] sm:$0xff]
        %v601 = vld [vmem:[%s596 + $0x47] sm:$0xff]
        %v602 = vld [vmem:[%s596 + $0x4f] sm:$0xff]
        %v603 = vld [vmem:[%s596 + $0x67] sm:$0xff]
        %v604 = vld [vmem:[%s596 + $0x6f] sm:$0xff]
        %v605 = vld [vmem:[%s596 + $0x87] sm:$0xff]
        %v606 = vld [vmem:[%s596 + $0x8f] sm:$0xff]
        %v607 = vld [vmem:[%s596 + $0xa7] sm:$0xff]
        %v608 = vld [vmem:[%s596 + $0xaf] sm:$0xff]
        %v609 = vld [vmem:[%s596 + $0xc7] sm:$0xff]
        %v610 = vld [vmem:[%s596 + $0xcf] sm:$0xff]
        %v611 = vld [vmem:[%s596 + $0xe7] sm:$0xff]
        %v612 = vld [vmem:[%s596 + $0xef] sm:$0xff]
        %v613 = vlaneseq
        %v614 = vshrl.u32 %v613, 7
        %v615 = vsub.s32 0, %v614
        %v616 = vrot.slane %v445, %v615
        %v617 = vmul.f32 %v597, %v616
        %v618 = vmul.f32 %v598, %v616
        %v619 = vmul.f32 %v599, %v616
        %v620 = vmul.f32 %v600, %v616
        %v621 = vmul.f32 %v601, %v616
        %v622 = vmul.f32 %v602, %v616
        %v623 = vmul.f32 %v603, %v616
        %v624 = vmul.f32 %v604, %v616
        %v625 = vmul.f32 %v605, %v616
        %v626 = vmul.f32 %v606, %v616
        %v627 = vmul.f32 %v607, %v616
        %v628 = vmul.f32 %v608, %v616
        %v629 = vmul.f32 %v609, %v616
        %v630 = vmul.f32 %v610, %v616
        %v631 = vmul.f32 %v611, %v616
        %v632 = vmul.f32 %v612, %v616
        %v633 = vadd.f32 %v578, %v617
        %v634 = vadd.f32 %v579, %v618
        %v635 = vadd.f32 %v580, %v619
        %v636 = vadd.f32 %v581, %v620
        %v637 = vadd.f32 %v582, %v621
        %v638 = vadd.f32 %v583, %v622
        %v639 = vadd.f32 %v584, %v623
        %v640 = vadd.f32 %v585, %v624
        %v641 = vadd.f32 %v586, %v625
        %v642 = vadd.f32 %v587, %v626
        %v643 = vadd.f32 %v588, %v627
        %v644 = vadd.f32 %v589, %v628
        %v645 = vadd.f32 %v590, %v629
        %v646 = vadd.f32 %v591, %v630
        %v647 = vadd.f32 %v592, %v631
        %v648 = vadd.f32 %v593, %v632
        %v649 = vld [vmem:[%s596 + $0x8] sm:$0xff]
        %v650 = vld [vmem:[%s596 + $0x10] sm:$0xff]
        %v651 = vld [vmem:[%s596 + $0x28] sm:$0xff]
        %v652 = vld [vmem:[%s596 + $0x30] sm:$0xff]
        %v653 = vld [vmem:[%s596 + $0x48] sm:$0xff]
        %v654 = vld [vmem:[%s596 + $0x50] sm:$0xff]
        %v655 = vld [vmem:[%s596 + $0x68] sm:$0xff]
        %v656 = vld [vmem:[%s596 + $0x70] sm:$0xff]
        %v657 = vld [vmem:[%s596 + $0x88] sm:$0xff]
        %v658 = vld [vmem:[%s596 + $0x90] sm:$0xff]
        %v659 = vld [vmem:[%s596 + $0xa8] sm:$0xff]
        %v660 = vld [vmem:[%s596 + $0xb0] sm:$0xff]
        %v661 = vld [vmem:[%s596 + $0xc8] sm:$0xff]
        %v662 = vld [vmem:[%s596 + $0xd0] sm:$0xff]
        %v663 = vld [vmem:[%s596 + $0xe8] sm:$0xff]
        %v664 = vld [vmem:[%s596 + $0xf0] sm:$0xff]
        %v665 = vlaneseq
        %v666 = vshrl.u32 %v665, 7
        %v667 = vsub.s32 0, %v666
        %v668 = vrot.slane %v446, %v667
        %v669 = vmul.f32 %v649, %v668
        %v670 = vmul.f32 %v650, %v668
        %v671 = vmul.f32 %v651, %v668
        %v672 = vmul.f32 %v652, %v668
        %v673 = vmul.f32 %v653, %v668
        %v674 = vmul.f32 %v654, %v668
        %v675 = vmul.f32 %v655, %v668
        %v676 = vmul.f32 %v656, %v668
        %v677 = vmul.f32 %v657, %v668
        %v678 = vmul.f32 %v658, %v668
        %v679 = vmul.f32 %v659, %v668
        %v680 = vmul.f32 %v660, %v668
        %v681 = vmul.f32 %v661, %v668
        %v682 = vmul.f32 %v662, %v668
        %v683 = vmul.f32 %v663, %v668
        %v684 = vmul.f32 %v664, %v668
        %v685 = vadd.f32 %v633, %v669
        %v686 = vadd.f32 %v634, %v670
        %v687 = vadd.f32 %v635, %v671
        %v688 = vadd.f32 %v636, %v672
        %v689 = vadd.f32 %v637, %v673
        %v690 = vadd.f32 %v638, %v674
        %v691 = vadd.f32 %v639, %v675
        %v692 = vadd.f32 %v640, %v676
        %v693 = vadd.f32 %v641, %v677
        %v694 = vadd.f32 %v642, %v678
        %v695 = vadd.f32 %v643, %v679
        %v696 = vadd.f32 %v644, %v680
        %v697 = vadd.f32 %v645, %v681
        %v698 = vadd.f32 %v646, %v682
        %v699 = vadd.f32 %v647, %v683
        %v700 = vadd.f32 %v648, %v684
        %v701 = vld [vmem:[%s596 + $0x9] sm:$0xff]
        %v702 = vld [vmem:[%s596 + $0x11] sm:$0xff]
        %v703 = vld [vmem:[%s596 + $0x29] sm:$0xff]
        %v704 = vld [vmem:[%s596 + $0x31] sm:$0xff]
        %v705 = vld [vmem:[%s596 + $0x49] sm:$0xff]
        %v706 = vld [vmem:[%s596 + $0x51] sm:$0xff]
        %v707 = vld [vmem:[%s596 + $0x69] sm:$0xff]
        %v708 = vld [vmem:[%s596 + $0x71] sm:$0xff]
        %v709 = vld [vmem:[%s596 + $0x89] sm:$0xff]
        %v710 = vld [vmem:[%s596 + $0x91] sm:$0xff]
        %v711 = vld [vmem:[%s596 + $0xa9] sm:$0xff]
        %v712 = vld [vmem:[%s596 + $0xb1] sm:$0xff]
        %v713 = vld [vmem:[%s596 + $0xc9] sm:$0xff]
        %v714 = vld [vmem:[%s596 + $0xd1] sm:$0xff]
        %v715 = vld [vmem:[%s596 + $0xe9] sm:$0xff]
        %v716 = vld [vmem:[%s596 + $0xf1] sm:$0xff]
        %v717 = vlaneseq
        %v718 = vshrl.u32 %v717, 7
        %v719 = vsub.s32 0, %v718
        %v720 = vrot.slane %v447, %v719
        %v721 = vmul.f32 %v701, %v720
        %v722 = vmul.f32 %v702, %v720
        %v723 = vmul.f32 %v703, %v720
        %v724 = vmul.f32 %v704, %v720
        %v725 = vmul.f32 %v705, %v720
        %v726 = vmul.f32 %v706, %v720
        %v727 = vmul.f32 %v707, %v720
        %v728 = vmul.f32 %v708, %v720
        %v729 = vmul.f32 %v709, %v720
        %v730 = vmul.f32 %v710, %v720
        %v731 = vmul.f32 %v711, %v720
        %v732 = vmul.f32 %v712, %v720
        %v733 = vmul.f32 %v713, %v720
        %v734 = vmul.f32 %v714, %v720
        %v735 = vmul.f32 %v715, %v720
        %v736 = vmul.f32 %v716, %v720
        %v737 = vadd.f32 %v685, %v721
        %v738 = vadd.f32 %v686, %v722
        %v739 = vadd.f32 %v687, %v723
        %v740 = vadd.f32 %v688, %v724
        %v741 = vadd.f32 %v689, %v725
        %v742 = vadd.f32 %v690, %v726
        %v743 = vadd.f32 %v691, %v727
        %v744 = vadd.f32 %v692, %v728
        %v745 = vadd.f32 %v693, %v729
        %v746 = vadd.f32 %v694, %v730
        %v747 = vadd.f32 %v695, %v731
        %v748 = vadd.f32 %v696, %v732
        %v749 = vadd.f32 %v697, %v733
        %v750 = vadd.f32 %v698, %v734
        %v751 = vadd.f32 %v699, %v735
        %v752 = vadd.f32 %v700, %v736
        %s753 = sadd.s32 0, 2
        %s754 = smul.u32 %s753, 32
        %s755 = scalar_lea.vmem [#allocation2], %s754
        %v756 = vld [vmem:[%s755 + $0x7] sm:$0xff]
        %v757 = vld [vmem:[%s755 + $0xf] sm:$0xff]
        %v758 = vld [vmem:[%s755 + $0x27] sm:$0xff]
        %v759 = vld [vmem:[%s755 + $0x2f] sm:$0xff]
        %v760 = vld [vmem:[%s755 + $0x47] sm:$0xff]
        %v761 = vld [vmem:[%s755 + $0x4f] sm:$0xff]
        %v762 = vld [vmem:[%s755 + $0x67] sm:$0xff]
        %v763 = vld [vmem:[%s755 + $0x6f] sm:$0xff]
        %v764 = vld [vmem:[%s755 + $0x87] sm:$0xff]
        %v765 = vld [vmem:[%s755 + $0x8f] sm:$0xff]
        %v766 = vld [vmem:[%s755 + $0xa7] sm:$0xff]
        %v767 = vld [vmem:[%s755 + $0xaf] sm:$0xff]
        %v768 = vld [vmem:[%s755 + $0xc7] sm:$0xff]
        %v769 = vld [vmem:[%s755 + $0xcf] sm:$0xff]
        %v770 = vld [vmem:[%s755 + $0xe7] sm:$0xff]
        %v771 = vld [vmem:[%s755 + $0xef] sm:$0xff]
        %v772 = vlaneseq
        %v773 = vshrl.u32 %v772, 7
        %v774 = vsub.s32 0, %v773
        %v775 = vrot.slane %v448, %v774
        %v776 = vmul.f32 %v756, %v775
        %v777 = vmul.f32 %v757, %v775
        %v778 = vmul.f32 %v758, %v775
        %v779 = vmul.f32 %v759, %v775
        %v780 = vmul.f32 %v760, %v775
        %v781 = vmul.f32 %v761, %v775
        %v782 = vmul.f32 %v762, %v775
        %v783 = vmul.f32 %v763, %v775
        %v784 = vmul.f32 %v764, %v775
        %v785 = vmul.f32 %v765, %v775
        %v786 = vmul.f32 %v766, %v775
        %v787 = vmul.f32 %v767, %v775
        %v788 = vmul.f32 %v768, %v775
        %v789 = vmul.f32 %v769, %v775
        %v790 = vmul.f32 %v770, %v775
        %v791 = vmul.f32 %v771, %v775
        %v792 = vadd.f32 %v737, %v776
        %v793 = vadd.f32 %v738, %v777
        %v794 = vadd.f32 %v739, %v778
        %v795 = vadd.f32 %v740, %v779
        %v796 = vadd.f32 %v741, %v780
        %v797 = vadd.f32 %v742, %v781
        %v798 = vadd.f32 %v743, %v782
        %v799 = vadd.f32 %v744, %v783
        %v800 = vadd.f32 %v745, %v784
        %v801 = vadd.f32 %v746, %v785
        %v802 = vadd.f32 %v747, %v786
        %v803 = vadd.f32 %v748, %v787
        %v804 = vadd.f32 %v749, %v788
        %v805 = vadd.f32 %v750, %v789
        %v806 = vadd.f32 %v751, %v790
        %v807 = vadd.f32 %v752, %v791
        %v808 = vld [vmem:[%s755 + $0x8] sm:$0xff]
        %v809 = vld [vmem:[%s755 + $0x10] sm:$0xff]
        %v810 = vld [vmem:[%s755 + $0x28] sm:$0xff]
        %v811 = vld [vmem:[%s755 + $0x30] sm:$0xff]
        %v812 = vld [vmem:[%s755 + $0x48] sm:$0xff]
        %v813 = vld [vmem:[%s755 + $0x50] sm:$0xff]
        %v814 = vld [vmem:[%s755 + $0x68] sm:$0xff]
        %v815 = vld [vmem:[%s755 + $0x70] sm:$0xff]
        %v816 = vld [vmem:[%s755 + $0x88] sm:$0xff]
        %v817 = vld [vmem:[%s755 + $0x90] sm:$0xff]
        %v818 = vld [vmem:[%s755 + $0xa8] sm:$0xff]
        %v819 = vld [vmem:[%s755 + $0xb0] sm:$0xff]
        %v820 = vld [vmem:[%s755 + $0xc8] sm:$0xff]
        %v821 = vld [vmem:[%s755 + $0xd0] sm:$0xff]
        %v822 = vld [vmem:[%s755 + $0xe8] sm:$0xff]
        %v823 = vld [vmem:[%s755 + $0xf0] sm:$0xff]
        %v824 = vlaneseq
        %v825 = vshrl.u32 %v824, 7
        %v826 = vsub.s32 0, %v825
        %v827 = vrot.slane %v449, %v826
        %v828 = vmul.f32 %v808, %v827
        %v829 = vmul.f32 %v809, %v827
        %v830 = vmul.f32 %v810, %v827
        %v831 = vmul.f32 %v811, %v827
        %v832 = vmul.f32 %v812, %v827
        %v833 = vmul.f32 %v813, %v827
        %v834 = vmul.f32 %v814, %v827
        %v835 = vmul.f32 %v815, %v827
        %v836 = vmul.f32 %v816, %v827
        %v837 = vmul.f32 %v817, %v827
        %v838 = vmul.f32 %v818, %v827
        %v839 = vmul.f32 %v819, %v827
        %v840 = vmul.f32 %v820, %v827
        %v841 = vmul.f32 %v821, %v827
        %v842 = vmul.f32 %v822, %v827
        %v843 = vmul.f32 %v823, %v827
        %v844 = vadd.f32 %v792, %v828
        %v845 = vadd.f32 %v793, %v829
        %v846 = vadd.f32 %v794, %v830
        %v847 = vadd.f32 %v795, %v831
        %v848 = vadd.f32 %v796, %v832
        %v849 = vadd.f32 %v797, %v833
        %v850 = vadd.f32 %v798, %v834
        %v851 = vadd.f32 %v799, %v835
        %v852 = vadd.f32 %v800, %v836
        %v853 = vadd.f32 %v801, %v837
        %v854 = vadd.f32 %v802, %v838
        %v855 = vadd.f32 %v803, %v839
        %v856 = vadd.f32 %v804, %v840
        %v857 = vadd.f32 %v805, %v841
        %v858 = vadd.f32 %v806, %v842
        %v859 = vadd.f32 %v807, %v843
        %v860 = vld [vmem:[%s755 + $0x9] sm:$0xff]
        %v861 = vld [vmem:[%s755 + $0x11] sm:$0xff]
        %v862 = vld [vmem:[%s755 + $0x29] sm:$0xff]
        %v863 = vld [vmem:[%s755 + $0x31] sm:$0xff]
        %v864 = vld [vmem:[%s755 + $0x49] sm:$0xff]
        %v865 = vld [vmem:[%s755 + $0x51] sm:$0xff]
        %v866 = vld [vmem:[%s755 + $0x69] sm:$0xff]
        %v867 = vld [vmem:[%s755 + $0x71] sm:$0xff]
        %v868 = vld [vmem:[%s755 + $0x89] sm:$0xff]
        %v869 = vld [vmem:[%s755 + $0x91] sm:$0xff]
        %v870 = vld [vmem:[%s755 + $0xa9] sm:$0xff]
        %v871 = vld [vmem:[%s755 + $0xb1] sm:$0xff]
        %v872 = vld [vmem:[%s755 + $0xc9] sm:$0xff]
        %v873 = vld [vmem:[%s755 + $0xd1] sm:$0xff]
        %v874 = vld [vmem:[%s755 + $0xe9] sm:$0xff]
        %v875 = vld [vmem:[%s755 + $0xf1] sm:$0xff]
        %v876 = vlaneseq
        %v877 = vshrl.u32 %v876, 7
        %v878 = vsub.s32 0, %v877
        %v879 = vrot.slane %v450, %v878
        %v880 = vmul.f32 %v860, %v879
        %v881 = vmul.f32 %v861, %v879
        %v882 = vmul.f32 %v862, %v879
        %v883 = vmul.f32 %v863, %v879
        %v884 = vmul.f32 %v864, %v879
        %v885 = vmul.f32 %v865, %v879
        %v886 = vmul.f32 %v866, %v879
        %v887 = vmul.f32 %v867, %v879
        %v888 = vmul.f32 %v868, %v879
        %v889 = vmul.f32 %v869, %v879
        %v890 = vmul.f32 %v870, %v879
        %v891 = vmul.f32 %v871, %v879
        %v892 = vmul.f32 %v872, %v879
        %v893 = vmul.f32 %v873, %v879
        %v894 = vmul.f32 %v874, %v879
        %v895 = vmul.f32 %v875, %v879
        %v896 = vadd.f32 %v844, %v880
        %v897 = vadd.f32 %v845, %v881
        %v898 = vadd.f32 %v846, %v882
        %v899 = vadd.f32 %v847, %v883
        %v900 = vadd.f32 %v848, %v884
        %v901 = vadd.f32 %v849, %v885
        %v902 = vadd.f32 %v850, %v886
        %v903 = vadd.f32 %v851, %v887
        %v904 = vadd.f32 %v852, %v888
        %v905 = vadd.f32 %v853, %v889
        %v906 = vadd.f32 %v854, %v890
        %v907 = vadd.f32 %v855, %v891
        %v908 = vadd.f32 %v856, %v892
        %v909 = vadd.f32 %v857, %v893
        %v910 = vadd.f32 %v858, %v894
        %v911 = vadd.f32 %v859, %v895
        %v913 = vlaneseq
        %v914 = vshrl.u32 %v913, 7
        %v915 = vsub.s32 0, %v914
        %v916 = vrot.slane %v451, %v915
        %v918 = vadd.f32 %v896, %v916
        %v919 = vadd.f32 %v897, %v916
        %v920 = vadd.f32 %v898, %v916
        %v921 = vadd.f32 %v899, %v916
        %v922 = vadd.f32 %v900, %v916
        %v923 = vadd.f32 %v901, %v916
        %v924 = vadd.f32 %v902, %v916
        %v925 = vadd.f32 %v903, %v916
        %v926 = vadd.f32 %v904, %v916
        %v927 = vadd.f32 %v905, %v916
        %v928 = vadd.f32 %v906, %v916
        %v929 = vadd.f32 %v907, %v916
        %v930 = vadd.f32 %v908, %v916
        %v931 = vadd.f32 %v909, %v916
        %v932 = vadd.f32 %v910, %v916
        %v933 = vadd.f32 %v911, %v916
        %s934 = smul.u32 0, 16
        %s935 = scalar_lea.vmem %s325, %s934 [#allocation9]
        %936 = vst [vmem:[%s935] sm:$0xff] %v918
        %937 = vst [vmem:[%s935 + $0x8] sm:$0xff] %v919
        %938 = vst [vmem:[%s935 + $0x10] sm:$0xff] %v920
        %939 = vst [vmem:[%s935 + $0x18] sm:$0xff] %v921
        %940 = vst [vmem:[%s935 + $0x20] sm:$0xff] %v922
        %941 = vst [vmem:[%s935 + $0x28] sm:$0xff] %v923
        %942 = vst [vmem:[%s935 + $0x30] sm:$0xff] %v924
        %943 = vst [vmem:[%s935 + $0x38] sm:$0xff] %v925
        %944 = vst [vmem:[%s935 + $0x40] sm:$0xff] %v926
        %945 = vst [vmem:[%s935 + $0x48] sm:$0xff] %v927
        %946 = vst [vmem:[%s935 + $0x50] sm:$0xff] %v928
        %947 = vst [vmem:[%s935 + $0x58] sm:$0xff] %v929
        %948 = vst [vmem:[%s935 + $0x60] sm:$0xff] %v930
        %949 = vst [vmem:[%s935 + $0x68] sm:$0xff] %v931
        %950 = vst [vmem:[%s935 + $0x70] sm:$0xff] %v932
        %951 = vst [vmem:[%s935 + $0x78] sm:$0xff] %v933
        %s952 = smul.u32 8, 32
        %s953 = scalar_lea.vmem [#allocation2], %s952
        %v954 = vld [vmem:[%s953 + $0x7] sm:$0xff]
        %v955 = vld [vmem:[%s953 + $0xf] sm:$0xff]
        %v956 = vld [vmem:[%s953 + $0x27] sm:$0xff]
        %v957 = vld [vmem:[%s953 + $0x2f] sm:$0xff]
        %v958 = vld [vmem:[%s953 + $0x47] sm:$0xff]
        %v959 = vld [vmem:[%s953 + $0x4f] sm:$0xff]
        %v960 = vld [vmem:[%s953 + $0x67] sm:$0xff]
        %v961 = vld [vmem:[%s953 + $0x6f] sm:$0xff]
        %v962 = vld [vmem:[%s953 + $0x87] sm:$0xff]
        %v963 = vld [vmem:[%s953 + $0x8f] sm:$0xff]
        %v964 = vld [vmem:[%s953 + $0xa7] sm:$0xff]
        %v965 = vld [vmem:[%s953 + $0xaf] sm:$0xff]
        %v966 = vld [vmem:[%s953 + $0xc7] sm:$0xff]
        %v967 = vld [vmem:[%s953 + $0xcf] sm:$0xff]
        %v968 = vld [vmem:[%s953 + $0xe7] sm:$0xff]
        %v969 = vld [vmem:[%s953 + $0xef] sm:$0xff]
        %v970 = vmul.f32 %v954, %v473
        %v971 = vmul.f32 %v955, %v473
        %v972 = vmul.f32 %v956, %v473
        %v973 = vmul.f32 %v957, %v473
        %v974 = vmul.f32 %v958, %v473
        %v975 = vmul.f32 %v959, %v473
        %v976 = vmul.f32 %v960, %v473
        %v977 = vmul.f32 %v961, %v473
        %v978 = vmul.f32 %v962, %v473
        %v979 = vmul.f32 %v963, %v473
        %v980 = vmul.f32 %v964, %v473
        %v981 = vmul.f32 %v965, %v473
        %v982 = vmul.f32 %v966, %v473
        %v983 = vmul.f32 %v967, %v473
        %v984 = vmul.f32 %v968, %v473
        %v985 = vmul.f32 %v969, %v473
        %v986 = vld [vmem:[%s953 + $0x8] sm:$0xff]
        %v987 = vld [vmem:[%s953 + $0x10] sm:$0xff]
        %v988 = vld [vmem:[%s953 + $0x28] sm:$0xff]
        %v989 = vld [vmem:[%s953 + $0x30] sm:$0xff]
        %v990 = vld [vmem:[%s953 + $0x48] sm:$0xff]
        %v991 = vld [vmem:[%s953 + $0x50] sm:$0xff]
        %v992 = vld [vmem:[%s953 + $0x68] sm:$0xff]
        %v993 = vld [vmem:[%s953 + $0x70] sm:$0xff]
        %v994 = vld [vmem:[%s953 + $0x88] sm:$0xff]
        %v995 = vld [vmem:[%s953 + $0x90] sm:$0xff]
        %v996 = vld [vmem:[%s953 + $0xa8] sm:$0xff]
        %v997 = vld [vmem:[%s953 + $0xb0] sm:$0xff]
        %v998 = vld [vmem:[%s953 + $0xc8] sm:$0xff]
        %v999 = vld [vmem:[%s953 + $0xd0] sm:$0xff]
        %v1000 = vld [vmem:[%s953 + $0xe8] sm:$0xff]
        %v1001 = vld [vmem:[%s953 + $0xf0] sm:$0xff]
        %v1002 = vmul.f32 %v986, %v509
        %v1003 = vmul.f32 %v987, %v509
        %v1004 = vmul.f32 %v988, %v509
        %v1005 = vmul.f32 %v989, %v509
        %v1006 = vmul.f32 %v990, %v509
        %v1007 = vmul.f32 %v991, %v509
        %v1008 = vmul.f32 %v992, %v509
        %v1009 = vmul.f32 %v993, %v509
        %v1010 = vmul.f32 %v994, %v509
        %v1011 = vmul.f32 %v995, %v509
        %v1012 = vmul.f32 %v996, %v509
        %v1013 = vmul.f32 %v997, %v509
        %v1014 = vmul.f32 %v998, %v509
        %v1015 = vmul.f32 %v999, %v509
        %v1016 = vmul.f32 %v1000, %v509
        %v1017 = vmul.f32 %v1001, %v509
        %v1018 = vadd.f32 %v970, %v1002
        %v1019 = vadd.f32 %v971, %v1003
        %v1020 = vadd.f32 %v972, %v1004
        %v1021 = vadd.f32 %v973, %v1005
        %v1022 = vadd.f32 %v974, %v1006
        %v1023 = vadd.f32 %v975, %v1007
        %v1024 = vadd.f32 %v976, %v1008
        %v1025 = vadd.f32 %v977, %v1009
        %v1026 = vadd.f32 %v978, %v1010
        %v1027 = vadd.f32 %v979, %v1011
        %v1028 = vadd.f32 %v980, %v1012
        %v1029 = vadd.f32 %v981, %v1013
        %v1030 = vadd.f32 %v982, %v1014
        %v1031 = vadd.f32 %v983, %v1015
        %v1032 = vadd.f32 %v984, %v1016
        %v1033 = vadd.f32 %v985, %v1017
        %v1034 = vld [vmem:[%s953 + $0x9] sm:$0xff]
        %v1035 = vld [vmem:[%s953 + $0x11] sm:$0xff]
        %v1036 = vld [vmem:[%s953 + $0x29] sm:$0xff]
        %v1037 = vld [vmem:[%s953 + $0x31] sm:$0xff]
        %v1038 = vld [vmem:[%s953 + $0x49] sm:$0xff]
        %v1039 = vld [vmem:[%s953 + $0x51] sm:$0xff]
        %v1040 = vld [vmem:[%s953 + $0x69] sm:$0xff]
        %v1041 = vld [vmem:[%s953 + $0x71] sm:$0xff]
        %v1042 = vld [vmem:[%s953 + $0x89] sm:$0xff]
        %v1043 = vld [vmem:[%s953 + $0x91] sm:$0xff]
        %v1044 = vld [vmem:[%s953 + $0xa9] sm:$0xff]
        %v1045 = vld [vmem:[%s953 + $0xb1] sm:$0xff]
        %v1046 = vld [vmem:[%s953 + $0xc9] sm:$0xff]
        %v1047 = vld [vmem:[%s953 + $0xd1] sm:$0xff]
        %v1048 = vld [vmem:[%s953 + $0xe9] sm:$0xff]
        %v1049 = vld [vmem:[%s953 + $0xf1] sm:$0xff]
        %v1050 = vmul.f32 %v1034, %v561
        %v1051 = vmul.f32 %v1035, %v561
        %v1052 = vmul.f32 %v1036, %v561
        %v1053 = vmul.f32 %v1037, %v561
        %v1054 = vmul.f32 %v1038, %v561
        %v1055 = vmul.f32 %v1039, %v561
        %v1056 = vmul.f32 %v1040, %v561
        %v1057 = vmul.f32 %v1041, %v561
        %v1058 = vmul.f32 %v1042, %v561
        %v1059 = vmul.f32 %v1043, %v561
        %v1060 = vmul.f32 %v1044, %v561
        %v1061 = vmul.f32 %v1045, %v561
        %v1062 = vmul.f32 %v1046, %v561
        %v1063 = vmul.f32 %v1047, %v561
        %v1064 = vmul.f32 %v1048, %v561
        %v1065 = vmul.f32 %v1049, %v561
        %v1066 = vadd.f32 %v1018, %v1050
        %v1067 = vadd.f32 %v1019, %v1051
        %v1068 = vadd.f32 %v1020, %v1052
        %v1069 = vadd.f32 %v1021, %v1053
        %v1070 = vadd.f32 %v1022, %v1054
        %v1071 = vadd.f32 %v1023, %v1055
        %v1072 = vadd.f32 %v1024, %v1056
        %v1073 = vadd.f32 %v1025, %v1057
        %v1074 = vadd.f32 %v1026, %v1058
        %v1075 = vadd.f32 %v1027, %v1059
        %v1076 = vadd.f32 %v1028, %v1060
        %v1077 = vadd.f32 %v1029, %v1061
        %v1078 = vadd.f32 %v1030, %v1062
        %v1079 = vadd.f32 %v1031, %v1063
        %v1080 = vadd.f32 %v1032, %v1064
        %v1081 = vadd.f32 %v1033, %v1065
        %s1082 = sadd.s32 8, 1
        %s1083 = smul.u32 %s1082, 32
        %s1084 = scalar_lea.vmem [#allocation2], %s1083
        %v1085 = vld [vmem:[%s1084 + $0x7] sm:$0xff]
        %v1086 = vld [vmem:[%s1084 + $0xf] sm:$0xff]
        %v1087 = vld [vmem:[%s1084 + $0x27] sm:$0xff]
        %v1088 = vld [vmem:[%s1084 + $0x2f] sm:$0xff]
        %v1089 = vld [vmem:[%s1084 + $0x47] sm:$0xff]
        %v1090 = vld [vmem:[%s1084 + $0x4f] sm:$0xff]
        %v1091 = vld [vmem:[%s1084 + $0x67] sm:$0xff]
        %v1092 = vld [vmem:[%s1084 + $0x6f] sm:$0xff]
        %v1093 = vld [vmem:[%s1084 + $0x87] sm:$0xff]
        %v1094 = vld [vmem:[%s1084 + $0x8f] sm:$0xff]
        %v1095 = vld [vmem:[%s1084 + $0xa7] sm:$0xff]
        %v1096 = vld [vmem:[%s1084 + $0xaf] sm:$0xff]
        %v1097 = vld [vmem:[%s1084 + $0xc7] sm:$0xff]
        %v1098 = vld [vmem:[%s1084 + $0xcf] sm:$0xff]
        %v1099 = vld [vmem:[%s1084 + $0xe7] sm:$0xff]
        %v1100 = vld [vmem:[%s1084 + $0xef] sm:$0xff]
        %v1101 = vmul.f32 %v1085, %v616
        %v1102 = vmul.f32 %v1086, %v616
        %v1103 = vmul.f32 %v1087, %v616
        %v1104 = vmul.f32 %v1088, %v616
        %v1105 = vmul.f32 %v1089, %v616
        %v1106 = vmul.f32 %v1090, %v616
        %v1107 = vmul.f32 %v1091, %v616
        %v1108 = vmul.f32 %v1092, %v616
        %v1109 = vmul.f32 %v1093, %v616
        %v1110 = vmul.f32 %v1094, %v616
        %v1111 = vmul.f32 %v1095, %v616
        %v1112 = vmul.f32 %v1096, %v616
        %v1113 = vmul.f32 %v1097, %v616
        %v1114 = vmul.f32 %v1098, %v616
        %v1115 = vmul.f32 %v1099, %v616
        %v1116 = vmul.f32 %v1100, %v616
        %v1117 = vadd.f32 %v1066, %v1101
        %v1118 = vadd.f32 %v1067, %v1102
        %v1119 = vadd.f32 %v1068, %v1103
        %v1120 = vadd.f32 %v1069, %v1104
        %v1121 = vadd.f32 %v1070, %v1105
        %v1122 = vadd.f32 %v1071, %v1106
        %v1123 = vadd.f32 %v1072, %v1107
        %v1124 = vadd.f32 %v1073, %v1108
        %v1125 = vadd.f32 %v1074, %v1109
        %v1126 = vadd.f32 %v1075, %v1110
        %v1127 = vadd.f32 %v1076, %v1111
        %v1128 = vadd.f32 %v1077, %v1112
        %v1129 = vadd.f32 %v1078, %v1113
        %v1130 = vadd.f32 %v1079, %v1114
        %v1131 = vadd.f32 %v1080, %v1115
        %v1132 = vadd.f32 %v1081, %v1116
        %v1133 = vld [vmem:[%s1084 + $0x8] sm:$0xff]
        %v1134 = vld [vmem:[%s1084 + $0x10] sm:$0xff]
        %v1135 = vld [vmem:[%s1084 + $0x28] sm:$0xff]
        %v1136 = vld [vmem:[%s1084 + $0x30] sm:$0xff]
        %v1137 = vld [vmem:[%s1084 + $0x48] sm:$0xff]
        %v1138 = vld [vmem:[%s1084 + $0x50] sm:$0xff]
        %v1139 = vld [vmem:[%s1084 + $0x68] sm:$0xff]
        %v1140 = vld [vmem:[%s1084 + $0x70] sm:$0xff]
        %v1141 = vld [vmem:[%s1084 + $0x88] sm:$0xff]
        %v1142 = vld [vmem:[%s1084 + $0x90] sm:$0xff]
        %v1143 = vld [vmem:[%s1084 + $0xa8] sm:$0xff]
        %v1144 = vld [vmem:[%s1084 + $0xb0] sm:$0xff]
        %v1145 = vld [vmem:[%s1084 + $0xc8] sm:$0xff]
        %v1146 = vld [vmem:[%s1084 + $0xd0] sm:$0xff]
        %v1147 = vld [vmem:[%s1084 + $0xe8] sm:$0xff]
        %v1148 = vld [vmem:[%s1084 + $0xf0] sm:$0xff]
        %v1149 = vmul.f32 %v1133, %v668
        %v1150 = vmul.f32 %v1134, %v668
        %v1151 = vmul.f32 %v1135, %v668
        %v1152 = vmul.f32 %v1136, %v668
        %v1153 = vmul.f32 %v1137, %v668
        %v1154 = vmul.f32 %v1138, %v668
        %v1155 = vmul.f32 %v1139, %v668
        %v1156 = vmul.f32 %v1140, %v668
        %v1157 = vmul.f32 %v1141, %v668
        %v1158 = vmul.f32 %v1142, %v668
        %v1159 = vmul.f32 %v1143, %v668
        %v1160 = vmul.f32 %v1144, %v668
        %v1161 = vmul.f32 %v1145, %v668
        %v1162 = vmul.f32 %v1146, %v668
        %v1163 = vmul.f32 %v1147, %v668
        %v1164 = vmul.f32 %v1148, %v668
        %v1165 = vadd.f32 %v1117, %v1149
        %v1166 = vadd.f32 %v1118, %v1150
        %v1167 = vadd.f32 %v1119, %v1151
        %v1168 = vadd.f32 %v1120, %v1152
        %v1169 = vadd.f32 %v1121, %v1153
        %v1170 = vadd.f32 %v1122, %v1154
        %v1171 = vadd.f32 %v1123, %v1155
        %v1172 = vadd.f32 %v1124, %v1156
        %v1173 = vadd.f32 %v1125, %v1157
        %v1174 = vadd.f32 %v1126, %v1158
        %v1175 = vadd.f32 %v1127, %v1159
        %v1176 = vadd.f32 %v1128, %v1160
        %v1177 = vadd.f32 %v1129, %v1161
        %v1178 = vadd.f32 %v1130, %v1162
        %v1179 = vadd.f32 %v1131, %v1163
        %v1180 = vadd.f32 %v1132, %v1164
        %v1181 = vld [vmem:[%s1084 + $0x9] sm:$0xff]
        %v1182 = vld [vmem:[%s1084 + $0x11] sm:$0xff]
        %v1183 = vld [vmem:[%s1084 + $0x29] sm:$0xff]
        %v1184 = vld [vmem:[%s1084 + $0x31] sm:$0xff]
        %v1185 = vld [vmem:[%s1084 + $0x49] sm:$0xff]
        %v1186 = vld [vmem:[%s1084 + $0x51] sm:$0xff]
        %v1187 = vld [vmem:[%s1084 + $0x69] sm:$0xff]
        %v1188 = vld [vmem:[%s1084 + $0x71] sm:$0xff]
        %v1189 = vld [vmem:[%s1084 + $0x89] sm:$0xff]
        %v1190 = vld [vmem:[%s1084 + $0x91] sm:$0xff]
        %v1191 = vld [vmem:[%s1084 + $0xa9] sm:$0xff]
        %v1192 = vld [vmem:[%s1084 + $0xb1] sm:$0xff]
        %v1193 = vld [vmem:[%s1084 + $0xc9] sm:$0xff]
        %v1194 = vld [vmem:[%s1084 + $0xd1] sm:$0xff]
        %v1195 = vld [vmem:[%s1084 + $0xe9] sm:$0xff]
        %v1196 = vld [vmem:[%s1084 + $0xf1] sm:$0xff]
        %v1197 = vmul.f32 %v1181, %v720
        %v1198 = vmul.f32 %v1182, %v720
        %v1199 = vmul.f32 %v1183, %v720
        %v1200 = vmul.f32 %v1184, %v720
        %v1201 = vmul.f32 %v1185, %v720
        %v1202 = vmul.f32 %v1186, %v720
        %v1203 = vmul.f32 %v1187, %v720
        %v1204 = vmul.f32 %v1188, %v720
        %v1205 = vmul.f32 %v1189, %v720
        %v1206 = vmul.f32 %v1190, %v720
        %v1207 = vmul.f32 %v1191, %v720
        %v1208 = vmul.f32 %v1192, %v720
        %v1209 = vmul.f32 %v1193, %v720
        %v1210 = vmul.f32 %v1194, %v720
        %v1211 = vmul.f32 %v1195, %v720
        %v1212 = vmul.f32 %v1196, %v720
        %v1213 = vadd.f32 %v1165, %v1197
        %v1214 = vadd.f32 %v1166, %v1198
        %v1215 = vadd.f32 %v1167, %v1199
        %v1216 = vadd.f32 %v1168, %v1200
        %v1217 = vadd.f32 %v1169, %v1201
        %v1218 = vadd.f32 %v1170, %v1202
        %v1219 = vadd.f32 %v1171, %v1203
        %v1220 = vadd.f32 %v1172, %v1204
        %v1221 = vadd.f32 %v1173, %v1205
        %v1222 = vadd.f32 %v1174, %v1206
        %v1223 = vadd.f32 %v1175, %v1207
        %v1224 = vadd.f32 %v1176, %v1208
        %v1225 = vadd.f32 %v1177, %v1209
        %v1226 = vadd.f32 %v1178, %v1210
        %v1227 = vadd.f32 %v1179, %v1211
        %v1228 = vadd.f32 %v1180, %v1212
        %s1229 = sadd.s32 8, 2
        %s1230 = smul.u32 %s1229, 32
        %s1231 = scalar_lea.vmem [#allocation2], %s1230
        %v1232 = vld [vmem:[%s1231 + $0x7] sm:$0xff]
        %v1233 = vld [vmem:[%s1231 + $0xf] sm:$0xff]
        %v1234 = vld [vmem:[%s1231 + $0x27] sm:$0xff]
        %v1235 = vld [vmem:[%s1231 + $0x2f] sm:$0xff]
        %v1236 = vld [vmem:[%s1231 + $0x47] sm:$0xff]
        %v1237 = vld [vmem:[%s1231 + $0x4f] sm:$0xff]
        %v1238 = vld [vmem:[%s1231 + $0x67] sm:$0xff]
        %v1239 = vld [vmem:[%s1231 + $0x6f] sm:$0xff]
        %v1240 = vld [vmem:[%s1231 + $0x87] sm:$0xff]
        %v1241 = vld [vmem:[%s1231 + $0x8f] sm:$0xff]
        %v1242 = vld [vmem:[%s1231 + $0xa7] sm:$0xff]
        %v1243 = vld [vmem:[%s1231 + $0xaf] sm:$0xff]
        %v1244 = vld [vmem:[%s1231 + $0xc7] sm:$0xff]
        %v1245 = vld [vmem:[%s1231 + $0xcf] sm:$0xff]
        %v1246 = vld [vmem:[%s1231 + $0xe7] sm:$0xff]
        %v1247 = vld [vmem:[%s1231 + $0xef] sm:$0xff]
        %v1248 = vmul.f32 %v1232, %v775
        %v1249 = vmul.f32 %v1233, %v775
        %v1250 = vmul.f32 %v1234, %v775
        %v1251 = vmul.f32 %v1235, %v775
        %v1252 = vmul.f32 %v1236, %v775
        %v1253 = vmul.f32 %v1237, %v775
        %v1254 = vmul.f32 %v1238, %v775
        %v1255 = vmul.f32 %v1239, %v775
        %v1256 = vmul.f32 %v1240, %v775
        %v1257 = vmul.f32 %v1241, %v775
        %v1258 = vmul.f32 %v1242, %v775
        %v1259 = vmul.f32 %v1243, %v775
        %v1260 = vmul.f32 %v1244, %v775
        %v1261 = vmul.f32 %v1245, %v775
        %v1262 = vmul.f32 %v1246, %v775
        %v1263 = vmul.f32 %v1247, %v775
        %v1264 = vadd.f32 %v1213, %v1248
        %v1265 = vadd.f32 %v1214, %v1249
        %v1266 = vadd.f32 %v1215, %v1250
        %v1267 = vadd.f32 %v1216, %v1251
        %v1268 = vadd.f32 %v1217, %v1252
        %v1269 = vadd.f32 %v1218, %v1253
        %v1270 = vadd.f32 %v1219, %v1254
        %v1271 = vadd.f32 %v1220, %v1255
        %v1272 = vadd.f32 %v1221, %v1256
        %v1273 = vadd.f32 %v1222, %v1257
        %v1274 = vadd.f32 %v1223, %v1258
        %v1275 = vadd.f32 %v1224, %v1259
        %v1276 = vadd.f32 %v1225, %v1260
        %v1277 = vadd.f32 %v1226, %v1261
        %v1278 = vadd.f32 %v1227, %v1262
        %v1279 = vadd.f32 %v1228, %v1263
        %v1280 = vld [vmem:[%s1231 + $0x8] sm:$0xff]
        %v1281 = vld [vmem:[%s1231 + $0x10] sm:$0xff]
        %v1282 = vld [vmem:[%s1231 + $0x28] sm:$0xff]
        %v1283 = vld [vmem:[%s1231 + $0x30] sm:$0xff]
        %v1284 = vld [vmem:[%s1231 + $0x48] sm:$0xff]
        %v1285 = vld [vmem:[%s1231 + $0x50] sm:$0xff]
        %v1286 = vld [vmem:[%s1231 + $0x68] sm:$0xff]
        %v1287 = vld [vmem:[%s1231 + $0x70] sm:$0xff]
        %v1288 = vld [vmem:[%s1231 + $0x88] sm:$0xff]
        %v1289 = vld [vmem:[%s1231 + $0x90] sm:$0xff]
        %v1290 = vld [vmem:[%s1231 + $0xa8] sm:$0xff]
        %v1291 = vld [vmem:[%s1231 + $0xb0] sm:$0xff]
        %v1292 = vld [vmem:[%s1231 + $0xc8] sm:$0xff]
        %v1293 = vld [vmem:[%s1231 + $0xd0] sm:$0xff]
        %v1294 = vld [vmem:[%s1231 + $0xe8] sm:$0xff]
        %v1295 = vld [vmem:[%s1231 + $0xf0] sm:$0xff]
        %v1296 = vmul.f32 %v1280, %v827
        %v1297 = vmul.f32 %v1281, %v827
        %v1298 = vmul.f32 %v1282, %v827
        %v1299 = vmul.f32 %v1283, %v827
        %v1300 = vmul.f32 %v1284, %v827
        %v1301 = vmul.f32 %v1285, %v827
        %v1302 = vmul.f32 %v1286, %v827
        %v1303 = vmul.f32 %v1287, %v827
        %v1304 = vmul.f32 %v1288, %v827
        %v1305 = vmul.f32 %v1289, %v827
        %v1306 = vmul.f32 %v1290, %v827
        %v1307 = vmul.f32 %v1291, %v827
        %v1308 = vmul.f32 %v1292, %v827
        %v1309 = vmul.f32 %v1293, %v827
        %v1310 = vmul.f32 %v1294, %v827
        %v1311 = vmul.f32 %v1295, %v827
        %v1312 = vadd.f32 %v1264, %v1296
        %v1313 = vadd.f32 %v1265, %v1297
        %v1314 = vadd.f32 %v1266, %v1298
        %v1315 = vadd.f32 %v1267, %v1299
        %v1316 = vadd.f32 %v1268, %v1300
        %v1317 = vadd.f32 %v1269, %v1301
        %v1318 = vadd.f32 %v1270, %v1302
        %v1319 = vadd.f32 %v1271, %v1303
        %v1320 = vadd.f32 %v1272, %v1304
        %v1321 = vadd.f32 %v1273, %v1305
        %v1322 = vadd.f32 %v1274, %v1306
        %v1323 = vadd.f32 %v1275, %v1307
        %v1324 = vadd.f32 %v1276, %v1308
        %v1325 = vadd.f32 %v1277, %v1309
        %v1326 = vadd.f32 %v1278, %v1310
        %v1327 = vadd.f32 %v1279, %v1311
        %v1328 = vld [vmem:[%s1231 + $0x9] sm:$0xff]
        %v1329 = vld [vmem:[%s1231 + $0x11] sm:$0xff]
        %v1330 = vld [vmem:[%s1231 + $0x29] sm:$0xff]
        %v1331 = vld [vmem:[%s1231 + $0x31] sm:$0xff]
        %v1332 = vld [vmem:[%s1231 + $0x49] sm:$0xff]
        %v1333 = vld [vmem:[%s1231 + $0x51] sm:$0xff]
        %v1334 = vld [vmem:[%s1231 + $0x69] sm:$0xff]
        %v1335 = vld [vmem:[%s1231 + $0x71] sm:$0xff]
        %v1336 = vld [vmem:[%s1231 + $0x89] sm:$0xff]
        %v1337 = vld [vmem:[%s1231 + $0x91] sm:$0xff]
        %v1338 = vld [vmem:[%s1231 + $0xa9] sm:$0xff]
        %v1339 = vld [vmem:[%s1231 + $0xb1] sm:$0xff]
        %v1340 = vld [vmem:[%s1231 + $0xc9] sm:$0xff]
        %v1341 = vld [vmem:[%s1231 + $0xd1] sm:$0xff]
        %v1342 = vld [vmem:[%s1231 + $0xe9] sm:$0xff]
        %v1343 = vld [vmem:[%s1231 + $0xf1] sm:$0xff]
        %v1344 = vmul.f32 %v1328, %v879
        %v1345 = vmul.f32 %v1329, %v879
        %v1346 = vmul.f32 %v1330, %v879
        %v1347 = vmul.f32 %v1331, %v879
        %v1348 = vmul.f32 %v1332, %v879
        %v1349 = vmul.f32 %v1333, %v879
        %v1350 = vmul.f32 %v1334, %v879
        %v1351 = vmul.f32 %v1335, %v879
        %v1352 = vmul.f32 %v1336, %v879
        %v1353 = vmul.f32 %v1337, %v879
        %v1354 = vmul.f32 %v1338, %v879
        %v1355 = vmul.f32 %v1339, %v879
        %v1356 = vmul.f32 %v1340, %v879
        %v1357 = vmul.f32 %v1341, %v879
        %v1358 = vmul.f32 %v1342, %v879
        %v1359 = vmul.f32 %v1343, %v879
        %v1360 = vadd.f32 %v1312, %v1344
        %v1361 = vadd.f32 %v1313, %v1345
        %v1362 = vadd.f32 %v1314, %v1346
        %v1363 = vadd.f32 %v1315, %v1347
        %v1364 = vadd.f32 %v1316, %v1348
        %v1365 = vadd.f32 %v1317, %v1349
        %v1366 = vadd.f32 %v1318, %v1350
        %v1367 = vadd.f32 %v1319, %v1351
        %v1368 = vadd.f32 %v1320, %v1352
        %v1369 = vadd.f32 %v1321, %v1353
        %v1370 = vadd.f32 %v1322, %v1354
        %v1371 = vadd.f32 %v1323, %v1355
        %v1372 = vadd.f32 %v1324, %v1356
        %v1373 = vadd.f32 %v1325, %v1357
        %v1374 = vadd.f32 %v1326, %v1358
        %v1375 = vadd.f32 %v1327, %v1359
        %v1376 = vadd.f32 %v1360, %v916
        %v1377 = vadd.f32 %v1361, %v916
        %v1378 = vadd.f32 %v1362, %v916
        %v1379 = vadd.f32 %v1363, %v916
        %v1380 = vadd.f32 %v1364, %v916
        %v1381 = vadd.f32 %v1365, %v916
        %v1382 = vadd.f32 %v1366, %v916
        %v1383 = vadd.f32 %v1367, %v916
        %v1384 = vadd.f32 %v1368, %v916
        %v1385 = vadd.f32 %v1369, %v916
        %v1386 = vadd.f32 %v1370, %v916
        %v1387 = vadd.f32 %v1371, %v916
        %v1388 = vadd.f32 %v1372, %v916
        %v1389 = vadd.f32 %v1373, %v916
        %v1390 = vadd.f32 %v1374, %v916
        %v1391 = vadd.f32 %v1375, %v916
        %s1392 = smul.u32 8, 16
        %s1393 = scalar_lea.vmem %s325, %s1392 [#allocation9]
        %1394 = vst [vmem:[%s1393] sm:$0xff] %v1376
        %1395 = vst [vmem:[%s1393 + $0x8] sm:$0xff] %v1377
        %1396 = vst [vmem:[%s1393 + $0x10] sm:$0xff] %v1378
        %1397 = vst [vmem:[%s1393 + $0x18] sm:$0xff] %v1379
        %1398 = vst [vmem:[%s1393 + $0x20] sm:$0xff] %v1380
        %1399 = vst [vmem:[%s1393 + $0x28] sm:$0xff] %v1381
        %1400 = vst [vmem:[%s1393 + $0x30] sm:$0xff] %v1382
        %1401 = vst [vmem:[%s1393 + $0x38] sm:$0xff] %v1383
        %1402 = vst [vmem:[%s1393 + $0x40] sm:$0xff] %v1384
        %1403 = vst [vmem:[%s1393 + $0x48] sm:$0xff] %v1385
        %1404 = vst [vmem:[%s1393 + $0x50] sm:$0xff] %v1386
        %1405 = vst [vmem:[%s1393 + $0x58] sm:$0xff] %v1387
        %1406 = vst [vmem:[%s1393 + $0x60] sm:$0xff] %v1388
        %1407 = vst [vmem:[%s1393 + $0x68] sm:$0xff] %v1389
        %1408 = vst [vmem:[%s1393 + $0x70] sm:$0xff] %v1390
        %1409 = vst [vmem:[%s1393 + $0x78] sm:$0xff] %v1391
        %s1410 = sand.u32 %s167, 1
        %s1411 = scalar_lea.sflag [#allocation5], %s1410
        %s1412 = sand.u32 %s167, 1
        %s1413 = smul.addr %s1412, 256
        %s1414 = scalar_lea.vmem [#allocation9], %s1413
        // Predicated region
        $region49: #{tpu_custom_call.1} parent=35 // pred_check
          %p1415 = pneg %p177
        $region50: #{tpu_custom_call.1} parent=35 // pred_check_branch
          %1417 = sbr.rel (%p1415) target = $region52
        $region51: #{tpu_custom_call.1} parent=35 // pred_region
          %s1418 = smul.u32 16, %s31
          %s1420 = ssub.s32 4096, 4096
          %1421 = vsyncadd %s1411, %s1420
          %s1422 = smul.addr %s1418, 2
          %s1423 = sadd.s32 %s30, %s1422
          %s1424 = smul.addr %s29, 32
          %s1425 = sadd.s32 %s1423, %s1424
          %s1426 = smul.addr %s1425, 128
          %s1427 = scalar_lea.hbm %s4, %s1426
          %s1428 = sshll.u32 %s1414, 4
          %s1429 = int_to_ptr.vmem [resolvable:$true] %s1428
          %1434 = dma.vmem_to_hbm [thread:$0]  %s1429, 4096, %s1427, %s1411, 128, 128, 8
        $region52: #{tpu_custom_call.1} parent=35 // pred_fallthru
          _
      $region36: #{tpu_custom_call.1} parent=5 // pred_fallthru
        _
      %p1435 = scmp.le.s32.totalorder 2, %s19
      // Predicated region
      $region53: #{tpu_custom_call.1} parent=5 // pred_check
        %p1436 = pneg %p1435
      $region54: #{tpu_custom_call.1} parent=5 // pred_check_branch
        %1438 = sbr.rel (%p1436) target = $region56
      $region55: #{tpu_custom_call.1} parent=5 // pred_region
        %s1439 = ssub.s32 %s19, 2
        // Predicated region
        $region57: #{tpu_custom_call.1} parent=55 // pred_check
          %p1440 = pneg %p183
        $region58: #{tpu_custom_call.1} parent=55 // pred_check_branch
          %1442 = sbr.rel (%p1440) target = $region60
        $region59: #{tpu_custom_call.1} parent=55 // pred_region
          %s1443 = sand.u32 %s168, 1
          %s1444 = scalar_lea.sflag [#allocation5], %s1443
          %s1445 = sand.u32 %s168, 1
          %s1446 = smul.addr %s1445, 256
          %s1447 = scalar_lea.vmem [#allocation9], %s1446
          %1448 = dma.done %s1444, 4096
        $region60: #{tpu_custom_call.1} parent=55 // pred_fallthru
          _
      $region56: #{tpu_custom_call.1} parent=5 // pred_fallthru
        _
    $region6: #{tpu_custom_call.1} parent=1 // loop_footer
      %s23 = sadd.s32 1, %s19
    $region7: #{tpu_custom_call.1} parent=1 // loop_footer_branch
      %18 = sbr.rel target = $region3
    $region8: #{tpu_custom_call.1} parent=1 // loop_exit
      _
    %1449 = vsyncpa [#allocation4], 1
    %s1450 = scalar_lea.sflag [#allocation4], 1
    %1451 = vsyncpa %s1450, 1
    %1452 = vsyncpa [#allocation7], 1
    %s1453 = scalar_lea.sflag [#allocation7], 1
    %1454 = vsyncpa %s1453, 1
    %1455 = vsyncpa [#allocation5], 1
    %s1456 = scalar_lea.sflag [#allocation5], 1
    %1457 = vsyncpa %s1456, 1

</llo_original>
